<compile_context>
chip_gen: v6e
topology: v6e:2x2x1
jax: 0.10.0
libtpu: 0.0.40
codegen_flags: <defaults>
</compile_context>

<pallas_src>
import functools

import jax
import jax.numpy as jnp
from jax import lax
from jax.experimental import pallas as pl
from jax.experimental.pallas import tpu as pltpu


def _single_stage_kernel(xf_ref, mask_ref,
                         w_dil_ref, b_dil_ref,
                         w_pw_ref, b_pw_ref,
                         w_out_ref, b_out_ref,
                         out_ref, feat_ref,
                         feat_sc,
                         *, num_layers, feat_lane_pad):
    """Processes one batch element: full SingleStage forward (after dim->F)."""
    T, F_ = feat_sc.shape

    m = mask_ref[0]                                   # (T, 1) f32
    m_b = jnp.broadcast_to(m, (T, F_))                # hoisted (T, F) broadcast
    row = lax.broadcasted_iota(jnp.int32, (T, 1), 0)  # narrow (T, 1) iota

    # initial feature = input 1x1 conv result (computed in the wrapper), f32
    feat_sc[...] = xf_ref[0]

    for i in range(num_layers):                       # static unroll over layers
        d = 2 ** i                                    # dilation
        feature = feat_sc[...]                        # f32 carry from VMEM
        # zero-padded shifts along time: x[t-d], x[t+d]
        x_prev = jnp.where(row >= d,
                           pltpu.roll(feature, shift=d, axis=0), 0.0)
        x_next = jnp.where(row < T - d,
                           pltpu.roll(feature, shift=T - d, axis=0), 0.0)
        # fused 3-tap dilated conv: one (T, 3F) x (3F, F) bf16 MXU dot
        xcat = jnp.concatenate([x_prev, feature, x_next],
                               axis=-1).astype(jnp.bfloat16)
        conv = (jnp.dot(xcat, w_dil_ref[i],
                        preferred_element_type=jnp.float32)
                + b_dil_ref[i])
        h = jnp.maximum(conv, 0.0)                    # ReLU
        h = (jnp.dot(h.astype(jnp.bfloat16), w_pw_ref[i],
                     preferred_element_type=jnp.float32)
             + b_pw_ref[i])                           # 1x1 conv
        # dropout == identity (eval); residual + mask, kept in f32
        feat_sc[...] = (feature + h) * m_b

    feature = feat_sc[...]
    # output 1x1 conv; weights are lane-padded to 128 so the store is dense
    out = (jnp.dot(feature.astype(jnp.bfloat16), w_out_ref[...],
                   preferred_element_type=jnp.float32)
           + b_out_ref[...]) * m
    out_ref[0] = out
    if feat_lane_pad > 0:
        feat_ref[0] = jnp.concatenate(
            [feature, jnp.zeros((T, feat_lane_pad), jnp.float32)], axis=-1)
    else:
        feat_ref[0] = feature


def single_stage_forward(x_nct, mask_nct, params, num_layers):
    """x_nct: (B, dim, T), mask_nct: (B, 1, T).  Returns (out, feature) in NCT."""
    B, dim, T = x_nct.shape
    F_ = params["w_in"].shape[1]
    C = params["w_out"].shape[1]

    LANE = 128
    C_pad = ((C + LANE - 1) // LANE) * LANE
    F_pad = ((F_ + LANE - 1) // LANE) * LANE

    x = jnp.transpose(x_nct, (0, 2, 1)).astype(jnp.float32)        # (B, T, dim)
    m = jnp.transpose(mask_nct[:, 0:1, :], (0, 2, 1)).astype(jnp.float32)

    # input 1x1 conv (dim -> F) in XLA: the kernel only ever sees (T, F) blocks.
    x_f = (jnp.einsum("btd,df->btf", x, params["w_in"])
           + params["b_in"]).astype(jnp.float32)

    # fused 3-tap weights (3F, F); bf16 operands for the MXU
    w_dil_cat = params["w_dil"].reshape(num_layers, 3 * F_, F_).astype(jnp.bfloat16)
    w_pw = params["w_pw"].astype(jnp.bfloat16)
    b_dil = params["b_dil"].astype(jnp.float32)
    b_pw = params["b_pw"].astype(jnp.float32)
    # lane-pad the output projection (zero columns -> zero padded outputs)
    w_out_p = (jnp.zeros((F_, C_pad), jnp.float32)
               .at[:, :C].set(params["w_out"]).astype(jnp.bfloat16))
    b_out_p = jnp.zeros((1, C_pad), jnp.float32).at[:, :C].set(params["b_out"])

    kernel = functools.partial(_single_stage_kernel,
                               num_layers=num_layers,
                               feat_lane_pad=F_pad - F_)

    # explicit VMEM budget: double-buffered I/O + weights + scratch, capped
    # v7x-safe (64 MiB physical VMEM) at 56 MiB, floor at 32 MiB.
    est = (2 * (T * F_ * 4 + T * 4)                       # x_f + mask (dbuf)
           + 2 * (T * C_pad * 4 + T * F_pad * 4)          # outputs (dbuf)
           + num_layers * (3 * F_ * F_ * 2 + F_ * F_ * 2 + 2 * F_ * 4)
           + F_ * C_pad * 2 + C_pad * 4                   # out proj
           + T * F_ * 4)                                  # feature scratch
    vmem_limit = int(min(max(2 * est, 32 * 2**20), 56 * 2**20))

    grid_spec = pltpu.PrefetchScalarGridSpec(
        num_scalar_prefetch=0,
        grid=(B,),
        in_specs=[
            pl.BlockSpec((1, T, F_), lambda b: (b, 0, 0)),               # x_f
            pl.BlockSpec((1, T, 1), lambda b: (b, 0, 0)),                # mask
            pl.BlockSpec((num_layers, 3 * F_, F_), lambda b: (0, 0, 0)),  # w_dil (fused)
            pl.BlockSpec((num_layers, 1, F_), lambda b: (0, 0, 0)),       # b_dil
            pl.BlockSpec((num_layers, F_, F_), lambda b: (0, 0, 0)),      # w_pw
            pl.BlockSpec((num_layers, 1, F_), lambda b: (0, 0, 0)),       # b_pw
            pl.BlockSpec((F_, C_pad), lambda b: (0, 0)),                  # w_out (padded)
            pl.BlockSpec((1, C_pad), lambda b: (0, 0)),                   # b_out (padded)
        ],
        out_specs=[
            pl.BlockSpec((1, T, C_pad), lambda b: (b, 0, 0)),
            pl.BlockSpec((1, T, F_pad), lambda b: (b, 0, 0)),
        ],
        scratch_shapes=[pltpu.VMEM((T, F_), jnp.float32)],   # f32 feature carry
    )

    out_p, feat_p = pl.pallas_call(
        kernel,
        out_shape=(jax.ShapeDtypeStruct((B, T, C_pad), jnp.float32),
                   jax.ShapeDtypeStruct((B, T, F_pad), jnp.float32)),
        grid_spec=grid_spec,
        compiler_params=pltpu.CompilerParams(
            dimension_semantics=("parallel",),     # batch is independent -> dual-TC on v7x
            vmem_limit_bytes=vmem_limit),
    )(x_f, m,
      w_dil_cat, b_dil,
      w_pw, b_pw,
      w_out_p, b_out_p)

    # strip lane padding, back to PyTorch NCT layout
    out = jnp.transpose(out_p[:, :, :C], (0, 2, 1))
    feat = jnp.transpose(feat_p[:, :, :F_], (0, 2, 1))
    return out, feat


def reference(x_nct, mask_nct, params, num_layers):
    """Pure-JAX f32 reference mirroring the PyTorch forward."""
    x = jnp.transpose(x_nct, (0, 2, 1))
    m = jnp.transpose(mask_nct[:, 0:1, :], (0, 2, 1))
    B, T, _ = x.shape
    feature = jnp.einsum("btd,df->btf", x, params["w_in"]) + params["b_in"]
    for i in range(num_layers):
        d = 2 ** i
        F_ = feature.shape[-1]
        pad = jnp.zeros((B, d, F_), jnp.float32)
        x_prev = jnp.concatenate([pad, feature[:, :T - d]], axis=1)
        x_next = jnp.concatenate([feature[:, d:], pad], axis=1)
        conv = (jnp.einsum("btf,fg->btg", x_prev, params["w_dil"][i, 0])
                + jnp.einsum("btf,fg->btg", feature, params["w_dil"][i, 1])
                + jnp.einsum("btf,fg->btg", x_next, params["w_dil"][i, 2])
                + params["b_dil"][i])
        h = jnp.maximum(conv, 0.0)
        h = jnp.einsum("btf,fg->btg", h, params["w_pw"][i]) + params["b_pw"][i]
        feature = (feature + h) * m
    out = (jnp.einsum("btf,fc->btc", feature, params["w_out"])
           + params["b_out"]) * m
    return jnp.transpose(out, (0, 2, 1)), jnp.transpose(feature, (0, 2, 1))


if __name__ == "__main__":
    key = jax.random.PRNGKey(0)
    B, dim, T = 2, 8, 16
    num_layers, F_, C = 3, 32, 5   # dilations 1, 2, 4

    ks = jax.random.split(key, 9)
    params = {
        "w_in":  0.1 * jax.random.normal(ks[0], (dim, F_), jnp.float32),
        "b_in":  0.1 * jax.random.normal(ks[1], (1, F_), jnp.float32),
        "w_dil": 0.1 * jax.random.normal(ks[2], (num_layers, 3, F_, F_), jnp.float32),
        "b_dil": 0.1 * jax.random.normal(ks[3], (num_layers, 1, F_), jnp.float32),
        "w_pw":  0.1 * jax.random.normal(ks[4], (num_layers, F_, F_), jnp.float32),
        "b_pw":  0.1 * jax.random.normal(ks[5], (num_layers, 1, F_), jnp.float32),
        "w_out": 0.1 * jax.random.normal(ks[6], (F_, C), jnp.float32),
        "b_out": 0.1 * jax.random.normal(ks[7], (1, C), jnp.float32),
    }

    x = jax.random.normal(ks[8], (B, dim, T), jnp.float32)
    mask = jnp.ones((B, 1, T), jnp.float32)
    mask = mask.at[1, :, 12:].set(0.0)   # second sequence padded past t=12

    out, feat = single_stage_forward(x, mask, params, num_layers)
    jax.block_until_ready((out, feat))

    ref_out, ref_feat = reference(x, mask, params, num_layers)
    assert out.shape == (B, C, T) and feat.shape == (B, F_, T)
    # bf16 MXU operands (f32 accumulation) -> slightly looser tolerances
    assert jnp.allclose(out, ref_out, atol=2e-2, rtol=2e-2)
    assert jnp.allclose(feat, ref_feat, atol=2e-2, rtol=2e-2)
    print("KERNEL_OK")
</pallas_src>

<mosaic_0001>
module attributes {stable_mosaic.version = 11 : i64} {
  func.func @_single_stage_kernel(%arg0: i32, %arg1: memref<1x16x32xf32, #tpu.memory_space<vmem>>, %arg2: memref<1x16x1xf32, #tpu.memory_space<vmem>>, %arg3: memref<3x96x32xbf16, #tpu.memory_space<vmem>>, %arg4: memref<3x1x32xf32, #tpu.memory_space<vmem>>, %arg5: memref<3x32x32xbf16, #tpu.memory_space<vmem>>, %arg6: memref<3x1x32xf32, #tpu.memory_space<vmem>>, %arg7: memref<32x128xbf16, #tpu.memory_space<vmem>>, %arg8: memref<1x128xf32, #tpu.memory_space<vmem>>, %arg9: memref<1x16x128xf32, #tpu.memory_space<vmem>>, %arg10: memref<1x16x128xf32, #tpu.memory_space<vmem>>, %arg11: memref<16x32xf32, #tpu.memory_space<vmem>>) attributes {dimension_semantics = [#tpu.dimension_semantics<parallel>], iteration_bounds = array<i64: 2>, scalar_prefetch = 0 : i64, scratch_operands = 1 : i64, tpu.core_type = #tpu.core_type<tc>, window_params = [{transform_indices = @transform_0, window_bounds = array<i64: 1, 16, 32>}, {transform_indices = @transform_1, window_bounds = array<i64: 1, 16, 1>}, {pipeline_mode = #tpu.pipeline_mode<synchronous>, transform_indices = @transform_2, window_bounds = array<i64: 3, 96, 32>}, {pipeline_mode = #tpu.pipeline_mode<synchronous>, transform_indices = @transform_3, window_bounds = array<i64: 3, 1, 32>}, {pipeline_mode = #tpu.pipeline_mode<synchronous>, transform_indices = @transform_4, window_bounds = array<i64: 3, 32, 32>}, {pipeline_mode = #tpu.pipeline_mode<synchronous>, transform_indices = @transform_5, window_bounds = array<i64: 3, 1, 32>}, {pipeline_mode = #tpu.pipeline_mode<synchronous>, transform_indices = @transform_6, window_bounds = array<i64: 32, 128>}, {pipeline_mode = #tpu.pipeline_mode<synchronous>, transform_indices = @transform_7, window_bounds = array<i64: 1, 128>}, {transform_indices = @transform_8, window_bounds = array<i64: 1, 16, 128>}, {transform_indices = @transform_9, window_bounds = array<i64: 1, 16, 128>}]} {
    %c0 = arith.constant 0 : index
    %c0_0 = arith.constant 0 : index
    %c0_1 = arith.constant 0 : index
    %0 = vector.load %arg2[%c0, %c0_0, %c0_1] : memref<1x16x1xf32, #tpu.memory_space<vmem>>, vector<1x16x1xf32>
    %1 = vector.shape_cast %0 : vector<1x16x1xf32> to vector<16x1xf32>
    %2 = vector.shape_cast %1 : vector<16x1xf32> to vector<16x1xf32>
    %3 = vector.broadcast %2 : vector<16x1xf32> to vector<16x32xf32>
    %4 = tpu.iota {dimensions = array<i32: 0>} : vector<16x1xi32>
    %c0_2 = arith.constant 0 : index
    %c0_3 = arith.constant 0 : index
    %c0_4 = arith.constant 0 : index
    %5 = vector.load %arg1[%c0_2, %c0_3, %c0_4] : memref<1x16x32xf32, #tpu.memory_space<vmem>>, vector<1x16x32xf32>
    %6 = vector.shape_cast %5 : vector<1x16x32xf32> to vector<16x32xf32>
    %c0_5 = arith.constant 0 : index
    %c0_6 = arith.constant 0 : index
    %7 = vector.load %arg11[%c0_5, %c0_6] : memref<16x32xf32, #tpu.memory_space<vmem>>, vector<16x32xf32>
    tpu.vector_store %arg11[%c0_5, %c0_6], %6 {strides = array<i32>} : memref<16x32xf32, #tpu.memory_space<vmem>>, vector<16x32xf32>,
    %c0_7 = arith.constant 0 : index
    %c0_8 = arith.constant 0 : index
    %8 = vector.load %arg11[%c0_7, %c0_8] : memref<16x32xf32, #tpu.memory_space<vmem>>, vector<16x32xf32>
    %c1_i32 = arith.constant 1 : i32
    %9 = vector.broadcast %c1_i32 : i32 to vector<16x1xi32>
    %10 = arith.cmpi sge, %4, %9 : vector<16x1xi32>
    %c1_i32_9 = arith.constant 1 : i32
    %11 = tpu.dynamic_rotate %8 by %c1_i32_9 dim 0 : vector<16x32xf32>, i32 -> vector<16x32xf32>
    %cst = arith.constant 0.000000e+00 : f32
    %12 = vector.shape_cast %10 : vector<16x1xi1> to vector<16x1xi1>
    %13 = vector.broadcast %12 : vector<16x1xi1> to vector<16x32xi1>
    %14 = vector.broadcast %cst : f32 to vector<16x32xf32>
    %15 = arith.select %13, %11, %14 : vector<16x32xi1>, vector<16x32xf32>
    %c15_i32 = arith.constant 15 : i32
    %16 = vector.broadcast %c15_i32 : i32 to vector<16x1xi32>
    %17 = arith.cmpi slt, %4, %16 : vector<16x1xi32>
    %c15_i32_10 = arith.constant 15 : i32
    %18 = tpu.dynamic_rotate %8 by %c15_i32_10 dim 0 : vector<16x32xf32>, i32 -> vector<16x32xf32>
    %cst_11 = arith.constant 0.000000e+00 : f32
    %19 = vector.shape_cast %17 : vector<16x1xi1> to vector<16x1xi1>
    %20 = vector.broadcast %19 : vector<16x1xi1> to vector<16x32xi1>
    %21 = vector.broadcast %cst_11 : f32 to vector<16x32xf32>
    %22 = arith.select %20, %18, %21 : vector<16x32xi1>, vector<16x32xf32>
    %23 = tpu.concatenate %15, %8, %22 in 1 : vector<16x32xf32>, vector<16x32xf32>, vector<16x32xf32> -> vector<16x96xf32>
    %24 = arith.truncf %23 : vector<16x96xf32> to vector<16x96xbf16>
    %c0_12 = arith.constant 0 : index
    %c0_13 = arith.constant 0 : index
    %c0_14 = arith.constant 0 : index
    %25 = vector.load %arg3[%c0_12, %c0_13, %c0_14] : memref<3x96x32xbf16, #tpu.memory_space<vmem>>, vector<1x96x32xbf16>
    %26 = vector.shape_cast %25 : vector<1x96x32xbf16> to vector<96x32xbf16>
    %cst_15 = arith.constant dense<0.000000e+00> : vector<16x32xf32>
    %27 = tpu.matmul %24, %26, %cst_15 {dimension_numbers = #tpu.dot_dimension_numbers<[1], [0], [0], [1], [0, 0, 1, 1], [], []>} : vector<16x96xbf16>, vector<96x32xbf16>, vector<16x32xf32> -> vector<16x32xf32>
    %c0_16 = arith.constant 0 : index
    %c0_17 = arith.constant 0 : index
    %c0_18 = arith.constant 0 : index
    %28 = vector.load %arg4[%c0_16, %c0_17, %c0_18] : memref<3x1x32xf32, #tpu.memory_space<vmem>>, vector<1x1x32xf32>
    %29 = vector.shape_cast %28 : vector<1x1x32xf32> to vector<1x32xf32>
    %30 = vector.broadcast %29 : vector<1x32xf32> to vector<16x32xf32>
    %31 = arith.addf %27, %30 : vector<16x32xf32>
    %cst_19 = arith.constant 0.000000e+00 : f32
    %32 = vector.broadcast %cst_19 : f32 to vector<16x32xf32>
    %33 = arith.maximumf %31, %32 : vector<16x32xf32>
    %34 = arith.truncf %33 : vector<16x32xf32> to vector<16x32xbf16>
    %c0_20 = arith.constant 0 : index
    %c0_21 = arith.constant 0 : index
    %c0_22 = arith.constant 0 : index
    %35 = vector.load %arg5[%c0_20, %c0_21, %c0_22] : memref<3x32x32xbf16, #tpu.memory_space<vmem>>, vector<1x32x32xbf16>
    %36 = vector.shape_cast %35 : vector<1x32x32xbf16> to vector<32x32xbf16>
    %cst_23 = arith.constant dense<0.000000e+00> : vector<16x32xf32>
    %37 = tpu.matmul %34, %36, %cst_23 {dimension_numbers = #tpu.dot_dimension_numbers<[1], [0], [0], [1], [0, 0, 1, 1], [], []>} : vector<16x32xbf16>, vector<32x32xbf16>, vector<16x32xf32> -> vector<16x32xf32>
    %c0_24 = arith.constant 0 : index
    %c0_25 = arith.constant 0 : index
    %c0_26 = arith.constant 0 : index
    %38 = vector.load %arg6[%c0_24, %c0_25, %c0_26] : memref<3x1x32xf32, #tpu.memory_space<vmem>>, vector<1x1x32xf32>
    %39 = vector.shape_cast %38 : vector<1x1x32xf32> to vector<1x32xf32>
    %40 = vector.broadcast %39 : vector<1x32xf32> to vector<16x32xf32>
    %41 = arith.addf %37, %40 : vector<16x32xf32>
    %42 = arith.addf %8, %41 : vector<16x32xf32>
    %43 = arith.mulf %42, %3 : vector<16x32xf32>
    %c0_27 = arith.constant 0 : index
    %c0_28 = arith.constant 0 : index
    %44 = vector.load %arg11[%c0_27, %c0_28] : memref<16x32xf32, #tpu.memory_space<vmem>>, vector<16x32xf32>
    tpu.vector_store %arg11[%c0_27, %c0_28], %43 {strides = array<i32>} : memref<16x32xf32, #tpu.memory_space<vmem>>, vector<16x32xf32>,
    %c0_29 = arith.constant 0 : index
    %c0_30 = arith.constant 0 : index
    %45 = vector.load %arg11[%c0_29, %c0_30] : memref<16x32xf32, #tpu.memory_space<vmem>>, vector<16x32xf32>
    %c2_i32 = arith.constant 2 : i32
    %46 = vector.broadcast %c2_i32 : i32 to vector<16x1xi32>
    %47 = arith.cmpi sge, %4, %46 : vector<16x1xi32>
    %c2_i32_31 = arith.constant 2 : i32
    %48 = tpu.dynamic_rotate %45 by %c2_i32_31 dim 0 : vector<16x32xf32>, i32 -> vector<16x32xf32>
    %cst_32 = arith.constant 0.000000e+00 : f32
    %49 = vector.shape_cast %47 : vector<16x1xi1> to vector<16x1xi1>
    %50 = vector.broadcast %49 : vector<16x1xi1> to vector<16x32xi1>
    %51 = vector.broadcast %cst_32 : f32 to vector<16x32xf32>
    %52 = arith.select %50, %48, %51 : vector<16x32xi1>, vector<16x32xf32>
    %c14_i32 = arith.constant 14 : i32
    %53 = vector.broadcast %c14_i32 : i32 to vector<16x1xi32>
    %54 = arith.cmpi slt, %4, %53 : vector<16x1xi32>
    %c14_i32_33 = arith.constant 14 : i32
    %55 = tpu.dynamic_rotate %45 by %c14_i32_33 dim 0 : vector<16x32xf32>, i32 -> vector<16x32xf32>
    %cst_34 = arith.constant 0.000000e+00 : f32
    %56 = vector.shape_cast %54 : vector<16x1xi1> to vector<16x1xi1>
    %57 = vector.broadcast %56 : vector<16x1xi1> to vector<16x32xi1>
    %58 = vector.broadcast %cst_34 : f32 to vector<16x32xf32>
    %59 = arith.select %57, %55, %58 : vector<16x32xi1>, vector<16x32xf32>
    %60 = tpu.concatenate %52, %45, %59 in 1 : vector<16x32xf32>, vector<16x32xf32>, vector<16x32xf32> -> vector<16x96xf32>
    %61 = arith.truncf %60 : vector<16x96xf32> to vector<16x96xbf16>
    %c1 = arith.constant 1 : index
    %c0_35 = arith.constant 0 : index
    %c0_36 = arith.constant 0 : index
    %62 = vector.load %arg3[%c1, %c0_35, %c0_36] : memref<3x96x32xbf16, #tpu.memory_space<vmem>>, vector<1x96x32xbf16>
    %63 = vector.shape_cast %62 : vector<1x96x32xbf16> to vector<96x32xbf16>
    %cst_37 = arith.constant dense<0.000000e+00> : vector<16x32xf32>
    %64 = tpu.matmul %61, %63, %cst_37 {dimension_numbers = #tpu.dot_dimension_numbers<[1], [0], [0], [1], [0, 0, 1, 1], [], []>} : vector<16x96xbf16>, vector<96x32xbf16>, vector<16x32xf32> -> vector<16x32xf32>
    %c1_38 = arith.constant 1 : index
    %c0_39 = arith.constant 0 : index
    %c0_40 = arith.constant 0 : index
    %65 = vector.load %arg4[%c1_38, %c0_39, %c0_40] : memref<3x1x32xf32, #tpu.memory_space<vmem>>, vector<1x1x32xf32>
    %66 = vector.shape_cast %65 : vector<1x1x32xf32> to vector<1x32xf32>
    %67 = vector.broadcast %66 : vector<1x32xf32> to vector<16x32xf32>
    %68 = arith.addf %64, %67 : vector<16x32xf32>
    %cst_41 = arith.constant 0.000000e+00 : f32
    %69 = vector.broadcast %cst_41 : f32 to vector<16x32xf32>
    %70 = arith.maximumf %68, %69 : vector<16x32xf32>
    %71 = arith.truncf %70 : vector<16x32xf32> to vector<16x32xbf16>
    %c1_42 = arith.constant 1 : index
    %c0_43 = arith.constant 0 : index
    %c0_44 = arith.constant 0 : index
    %72 = vector.load %arg5[%c1_42, %c0_43, %c0_44] : memref<3x32x32xbf16, #tpu.memory_space<vmem>>, vector<1x32x32xbf16>
    %73 = vector.shape_cast %72 : vector<1x32x32xbf16> to vector<32x32xbf16>
    %cst_45 = arith.constant dense<0.000000e+00> : vector<16x32xf32>
    %74 = tpu.matmul %71, %73, %cst_45 {dimension_numbers = #tpu.dot_dimension_numbers<[1], [0], [0], [1], [0, 0, 1, 1], [], []>} : vector<16x32xbf16>, vector<32x32xbf16>, vector<16x32xf32> -> vector<16x32xf32>
    %c1_46 = arith.constant 1 : index
    %c0_47 = arith.constant 0 : index
    %c0_48 = arith.constant 0 : index
    %75 = vector.load %arg6[%c1_46, %c0_47, %c0_48] : memref<3x1x32xf32, #tpu.memory_space<vmem>>, vector<1x1x32xf32>
    %76 = vector.shape_cast %75 : vector<1x1x32xf32> to vector<1x32xf32>
    %77 = vector.broadcast %76 : vector<1x32xf32> to vector<16x32xf32>
    %78 = arith.addf %74, %77 : vector<16x32xf32>
    %79 = arith.addf %45, %78 : vector<16x32xf32>
    %80 = arith.mulf %79, %3 : vector<16x32xf32>
    %c0_49 = arith.constant 0 : index
    %c0_50 = arith.constant 0 : index
    %81 = vector.load %arg11[%c0_49, %c0_50] : memref<16x32xf32, #tpu.memory_space<vmem>>, vector<16x32xf32>
    tpu.vector_store %arg11[%c0_49, %c0_50], %80 {strides = array<i32>} : memref<16x32xf32, #tpu.memory_space<vmem>>, vector<16x32xf32>,
    %c0_51 = arith.constant 0 : index
    %c0_52 = arith.constant 0 : index
    %82 = vector.load %arg11[%c0_51, %c0_52] : memref<16x32xf32, #tpu.memory_space<vmem>>, vector<16x32xf32>
    %c4_i32 = arith.constant 4 : i32
    %83 = vector.broadcast %c4_i32 : i32 to vector<16x1xi32>
    %84 = arith.cmpi sge, %4, %83 : vector<16x1xi32>
    %c4_i32_53 = arith.constant 4 : i32
    %85 = tpu.dynamic_rotate %82 by %c4_i32_53 dim 0 : vector<16x32xf32>, i32 -> vector<16x32xf32>
    %cst_54 = arith.constant 0.000000e+00 : f32
    %86 = vector.shape_cast %84 : vector<16x1xi1> to vector<16x1xi1>
    %87 = vector.broadcast %86 : vector<16x1xi1> to vector<16x32xi1>
    %88 = vector.broadcast %cst_54 : f32 to vector<16x32xf32>
    %89 = arith.select %87, %85, %88 : vector<16x32xi1>, vector<16x32xf32>
    %c12_i32 = arith.constant 12 : i32
    %90 = vector.broadcast %c12_i32 : i32 to vector<16x1xi32>
    %91 = arith.cmpi slt, %4, %90 : vector<16x1xi32>
    %c12_i32_55 = arith.constant 12 : i32
    %92 = tpu.dynamic_rotate %82 by %c12_i32_55 dim 0 : vector<16x32xf32>, i32 -> vector<16x32xf32>
    %cst_56 = arith.constant 0.000000e+00 : f32
    %93 = vector.shape_cast %91 : vector<16x1xi1> to vector<16x1xi1>
    %94 = vector.broadcast %93 : vector<16x1xi1> to vector<16x32xi1>
    %95 = vector.broadcast %cst_56 : f32 to vector<16x32xf32>
    %96 = arith.select %94, %92, %95 : vector<16x32xi1>, vector<16x32xf32>
    %97 = tpu.concatenate %89, %82, %96 in 1 : vector<16x32xf32>, vector<16x32xf32>, vector<16x32xf32> -> vector<16x96xf32>
    %98 = arith.truncf %97 : vector<16x96xf32> to vector<16x96xbf16>
    %c2 = arith.constant 2 : index
    %c0_57 = arith.constant 0 : index
    %c0_58 = arith.constant 0 : index
    %99 = vector.load %arg3[%c2, %c0_57, %c0_58] : memref<3x96x32xbf16, #tpu.memory_space<vmem>>, vector<1x96x32xbf16>
    %100 = vector.shape_cast %99 : vector<1x96x32xbf16> to vector<96x32xbf16>
    %cst_59 = arith.constant dense<0.000000e+00> : vector<16x32xf32>
    %101 = tpu.matmul %98, %100, %cst_59 {dimension_numbers = #tpu.dot_dimension_numbers<[1], [0], [0], [1], [0, 0, 1, 1], [], []>} : vector<16x96xbf16>, vector<96x32xbf16>, vector<16x32xf32> -> vector<16x32xf32>
    %c2_60 = arith.constant 2 : index
    %c0_61 = arith.constant 0 : index
    %c0_62 = arith.constant 0 : index
    %102 = vector.load %arg4[%c2_60, %c0_61, %c0_62] : memref<3x1x32xf32, #tpu.memory_space<vmem>>, vector<1x1x32xf32>
    %103 = vector.shape_cast %102 : vector<1x1x32xf32> to vector<1x32xf32>
    %104 = vector.broadcast %103 : vector<1x32xf32> to vector<16x32xf32>
    %105 = arith.addf %101, %104 : vector<16x32xf32>
    %cst_63 = arith.constant 0.000000e+00 : f32
    %106 = vector.broadcast %cst_63 : f32 to vector<16x32xf32>
    %107 = arith.maximumf %105, %106 : vector<16x32xf32>
    %108 = arith.truncf %107 : vector<16x32xf32> to vector<16x32xbf16>
    %c2_64 = arith.constant 2 : index
    %c0_65 = arith.constant 0 : index
    %c0_66 = arith.constant 0 : index
    %109 = vector.load %arg5[%c2_64, %c0_65, %c0_66] : memref<3x32x32xbf16, #tpu.memory_space<vmem>>, vector<1x32x32xbf16>
    %110 = vector.shape_cast %109 : vector<1x32x32xbf16> to vector<32x32xbf16>
    %cst_67 = arith.constant dense<0.000000e+00> : vector<16x32xf32>
    %111 = tpu.matmul %108, %110, %cst_67 {dimension_numbers = #tpu.dot_dimension_numbers<[1], [0], [0], [1], [0, 0, 1, 1], [], []>} : vector<16x32xbf16>, vector<32x32xbf16>, vector<16x32xf32> -> vector<16x32xf32>
    %c2_68 = arith.constant 2 : index
    %c0_69 = arith.constant 0 : index
    %c0_70 = arith.constant 0 : index
    %112 = vector.load %arg6[%c2_68, %c0_69, %c0_70] : memref<3x1x32xf32, #tpu.memory_space<vmem>>, vector<1x1x32xf32>
    %113 = vector.shape_cast %112 : vector<1x1x32xf32> to vector<1x32xf32>
    %114 = vector.broadcast %113 : vector<1x32xf32> to vector<16x32xf32>
    %115 = arith.addf %111, %114 : vector<16x32xf32>
    %116 = arith.addf %82, %115 : vector<16x32xf32>
    %117 = arith.mulf %116, %3 : vector<16x32xf32>
    %c0_71 = arith.constant 0 : index
    %c0_72 = arith.constant 0 : index
    %118 = vector.load %arg11[%c0_71, %c0_72] : memref<16x32xf32, #tpu.memory_space<vmem>>, vector<16x32xf32>
    tpu.vector_store %arg11[%c0_71, %c0_72], %117 {strides = array<i32>} : memref<16x32xf32, #tpu.memory_space<vmem>>, vector<16x32xf32>,
    %c0_73 = arith.constant 0 : index
    %c0_74 = arith.constant 0 : index
    %119 = vector.load %arg11[%c0_73, %c0_74] : memref<16x32xf32, #tpu.memory_space<vmem>>, vector<16x32xf32>
    %120 = arith.truncf %119 : vector<16x32xf32> to vector<16x32xbf16>
    %c0_75 = arith.constant 0 : index
    %c0_76 = arith.constant 0 : index
    %121 = vector.load %arg7[%c0_75, %c0_76] : memref<32x128xbf16, #tpu.memory_space<vmem>>, vector<32x128xbf16>
    %cst_77 = arith.constant dense<0.000000e+00> : vector<16x128xf32>
    %122 = tpu.matmul %120, %121, %cst_77 {dimension_numbers = #tpu.dot_dimension_numbers<[1], [0], [0], [1], [0, 0, 1, 1], [], []>} : vector<16x32xbf16>, vector<32x128xbf16>, vector<16x128xf32> -> vector<16x128xf32>
    %c0_78 = arith.constant 0 : index
    %c0_79 = arith.constant 0 : index
    %123 = vector.load %arg8[%c0_78, %c0_79] : memref<1x128xf32, #tpu.memory_space<vmem>>, vector<1x128xf32>
    %124 = vector.broadcast %123 : vector<1x128xf32> to vector<16x128xf32>
    %125 = arith.addf %122, %124 : vector<16x128xf32>
    %126 = vector.broadcast %1 : vector<16x1xf32> to vector<16x128xf32>
    %127 = arith.mulf %125, %126 : vector<16x128xf32>
    %c0_80 = arith.constant 0 : index
    %c0_81 = arith.constant 0 : index
    %c0_82 = arith.constant 0 : index
    %128 = vector.load %arg9[%c0_80, %c0_81, %c0_82] : memref<1x16x128xf32, #tpu.memory_space<vmem>>, vector<1x16x128xf32>
    %129 = vector.shape_cast %128 : vector<1x16x128xf32> to vector<16x128xf32>
    %130 = vector.shape_cast %127 : vector<16x128xf32> to vector<1x16x128xf32>
    tpu.vector_store %arg9[%c0_80, %c0_81, %c0_82], %130 {strides = array<i32>} : memref<1x16x128xf32, #tpu.memory_space<vmem>>, vector<1x16x128xf32>,
    %cst_83 = arith.constant 0.000000e+00 : f32
    %131 = vector.broadcast %cst_83 : f32 to vector<16x96xf32>
    %132 = tpu.concatenate %119, %131 in 1 : vector<16x32xf32>, vector<16x96xf32> -> vector<16x128xf32>
    %c0_84 = arith.constant 0 : index
    %c0_85 = arith.constant 0 : index
    %c0_86 = arith.constant 0 : index
    %133 = vector.load %arg10[%c0_84, %c0_85, %c0_86] : memref<1x16x128xf32, #tpu.memory_space<vmem>>, vector<1x16x128xf32>
    %134 = vector.shape_cast %133 : vector<1x16x128xf32> to vector<16x128xf32>
    %135 = vector.shape_cast %132 : vector<16x128xf32> to vector<1x16x128xf32>
    tpu.vector_store %arg10[%c0_84, %c0_85, %c0_86], %135 {strides = array<i32>} : memref<1x16x128xf32, #tpu.memory_space<vmem>>, vector<1x16x128xf32>,
    return
  }
  func.func @transform_0(%arg0: i32) -> (i32, i32, i32) {
    %c0_i32 = arith.constant 0 : i32
    %c0_i32_0 = arith.constant 0 : i32
    %c0_i32_1 = arith.constant 0 : i32
    return %arg0, %c0_i32, %c0_i32_0 : i32, i32, i32
  }
  func.func @transform_1(%arg0: i32) -> (i32, i32, i32) {
    %c0_i32 = arith.constant 0 : i32
    %c0_i32_0 = arith.constant 0 : i32
    %c0_i32_1 = arith.constant 0 : i32
    return %arg0, %c0_i32, %c0_i32_0 : i32, i32, i32
  }
  func.func @transform_2(%arg0: i32) -> (i32, i32, i32) {
    %c0_i32 = arith.constant 0 : i32
    %c0_i32_0 = arith.constant 0 : i32
    %c0_i32_1 = arith.constant 0 : i32
    %c0_i32_2 = arith.constant 0 : i32
    return %c0_i32, %c0_i32_0, %c0_i32_1 : i32, i32, i32
  }
  func.func @transform_3(%arg0: i32) -> (i32, i32, i32) {
    %c0_i32 = arith.constant 0 : i32
    %c0_i32_0 = arith.constant 0 : i32
    %c0_i32_1 = arith.constant 0 : i32
    %c0_i32_2 = arith.constant 0 : i32
    return %c0_i32, %c0_i32_0, %c0_i32_1 : i32, i32, i32
  }
  func.func @transform_4(%arg0: i32) -> (i32, i32, i32) {
    %c0_i32 = arith.constant 0 : i32
    %c0_i32_0 = arith.constant 0 : i32
    %c0_i32_1 = arith.constant 0 : i32
    %c0_i32_2 = arith.constant 0 : i32
    return %c0_i32, %c0_i32_0, %c0_i32_1 : i32, i32, i32
  }
  func.func @transform_5(%arg0: i32) -> (i32, i32, i32) {
    %c0_i32 = arith.constant 0 : i32
    %c0_i32_0 = arith.constant 0 : i32
    %c0_i32_1 = arith.constant 0 : i32
    %c0_i32_2 = arith.constant 0 : i32
    return %c0_i32, %c0_i32_0, %c0_i32_1 : i32, i32, i32
  }
  func.func @transform_6(%arg0: i32) -> (i32, i32) {
    %c0_i32 = arith.constant 0 : i32
    %c0_i32_0 = arith.constant 0 : i32
    %c0_i32_1 = arith.constant 0 : i32
    return %c0_i32, %c0_i32_0 : i32, i32
  }
  func.func @transform_7(%arg0: i32) -> (i32, i32) {
    %c0_i32 = arith.constant 0 : i32
    %c0_i32_0 = arith.constant 0 : i32
    %c0_i32_1 = arith.constant 0 : i32
    return %c0_i32, %c0_i32_0 : i32, i32
  }
  func.func @transform_8(%arg0: i32) -> (i32, i32, i32) {
    %c0_i32 = arith.constant 0 : i32
    %c0_i32_0 = arith.constant 0 : i32
    %c0_i32_1 = arith.constant 0 : i32
    return %arg0, %c0_i32, %c0_i32_0 : i32, i32, i32
  }
  func.func @transform_9(%arg0: i32) -> (i32, i32, i32) {
    %c0_i32 = arith.constant 0 : i32
    %c0_i32_0 = arith.constant 0 : i32
    %c0_i32_1 = arith.constant 0 : i32
    return %arg0, %c0_i32, %c0_i32_0 : i32, i32, i32
  }
}

</mosaic_0001>

<llo_original>
// kernel: tpu_custom_call.1
$region0: #{tpu_custom_call.1}
  #allocation0 [shape = 'u32[]', space=smem, size = 0x4, offset = 0x4, fixed_abs, tag = 'smem constant byte address 0x4 - core index']
  #allocation1 [shape = 'u32[144,128]{1,0:T(1,128)}', space=vmem, size = 0x12000, scoped, tag = 'internal scratch']
  #allocation2 [shape = 'f32[16,32]{1,0:T(8,128)}', space=vmem, size = 0x2000, scoped, tag = 'scratch operand']
  %s0 = inlined_call_operand.vmem [shape: f32[2,16,32], index: 0, kind: input, shape index: {}]
  %s1 = inlined_call_operand.vmem [shape: f32[2,16,1], index: 1, kind: input, shape index: {}]
  %s2 = inlined_call_operand.vmem [shape: bf16[3,96,32], index: 2, kind: input, shape index: {}]
  %s3 = inlined_call_operand.vmem [shape: f32[3,1,32], index: 3, kind: input, shape index: {}]
  %s4 = inlined_call_operand.vmem [shape: bf16[3,32,32], index: 4, kind: input, shape index: {}]
  %s5 = inlined_call_operand.vmem [shape: f32[3,1,32], index: 5, kind: input, shape index: {}]
  %s6 = inlined_call_operand.vmem [shape: bf16[32,128], index: 6, kind: input, shape index: {}]
  %s7 = inlined_call_operand.vmem [shape: f32[1,128], index: 7, kind: input, shape index: {}]
  %s8 = inlined_call_operand.hbm [shape: f32[2,16,128], index: 8, kind: output, shape index: {0}]
  %s9 = inlined_call_operand.hbm [shape: f32[2,16,128], index: 9, kind: output, shape index: {1}]
  %10 = xla_tuple %s8, %s9
  %s11 = sld [smem:[#allocation0]]
  $region73: #{tpu_custom_call.1} parent=0
    _
  %s13 = ssub.s32 1, %s11
  %s14 = scalar_select 0, %s13, %s11
  $region1: #{tpu_custom_call.1} parent=0
    #allocation3 [shape = 'u8[16384]{0}', space=vmem, size = 0x4000, scoped, tag = 'output window, operand 0']
    #allocation4 [shape = 's32[2]{0}', space=sflag, size = 0x8, scoped, tag = 'scoped memory for tpu_custom_call.1']
    #allocation5 [shape = 'u8[16384]{0}', space=vmem, size = 0x4000, scoped, tag = 'output window, operand 1']
    #allocation6 [shape = 's32[2]{0}', space=sflag, size = 0x8, scoped, tag = 'scoped memory for tpu_custom_call.1']
    %15 = vsyncpa [#allocation4], 0
    %s16 = scalar_lea.sflag [#allocation4], 1
    %17 = vsyncpa %s16, 0
    %18 = vsyncpa [#allocation6], 0
    %s19 = scalar_lea.sflag [#allocation6], 1
    %20 = vsyncpa %s19, 0
    loop: start=0, step=1, limit=4
    $region2: #{tpu_custom_call.1} parent=1 // loop_pre_header
      _
    $region3: #{tpu_custom_call.1} parent=1 // loop_header
      %s22 = sphi 0, %s26
      %p23 = scmp.ge.s32.totalorder %s22, 4
      %s32 = sphi 0, %s34
      %s35 = sphi 0, %s32
      %s36 = sphi 0, %s35
      %s52 = sphi 0, %s36
      %s58 = sphi 0, %s60
      %s61 = sphi 0, %s58
      %s62 = sphi 0, %s61
      %s78 = sphi 0, %s62
      %s82 = sphi 0, %s82
      %s84 = sphi 0, %s82
      %s85 = sphi 0, %s84
      %s99 = sphi 0, %s85
      %s103 = sphi 0, %s103
      %s105 = sphi 0, %s103
      %s106 = sphi 0, %s105
      %s120 = sphi 0, %s106
      %s124 = sphi 0, %s124
      %s126 = sphi 0, %s124
      %s127 = sphi 0, %s126
      %s141 = sphi 0, %s127
      %s145 = sphi 0, %s145
      %s147 = sphi 0, %s145
      %s148 = sphi 0, %s147
      %s162 = sphi 0, %s148
      %s166 = sphi 0, %s166
      %s168 = sphi 0, %s166
      %s169 = sphi 0, %s168
      %s183 = sphi 0, %s169
      %s187 = sphi 0, %s187
      %s189 = sphi 0, %s187
      %s190 = sphi 0, %s189
      %s204 = sphi 0, %s190
      %s210 = sphi 0, %s212
      %s213 = sphi 0, %s210
      %s214 = sphi 0, %s213
      %s230 = sphi 0, %s214
      %s236 = sphi 0, %s238
      %s239 = sphi 0, %s236
      %s240 = sphi 0, %s239
      %s256 = sphi 0, %s240
    $region4: #{tpu_custom_call.1} parent=1 // loop_header_branch
      %25 = sbr.rel (%p23) target = $region8
    $region5: #{tpu_custom_call.1} parent=1 // loop_body
      %s27 = ssub.s32 %s22, 1
      %s28 = ssub.s32 %s22, 2
      %s29 = sadd.s32 %s22, 1
      %s30 = ssub.s32 %s22, %s29
      %p31 = scmp.eq.s32.totalorder %s30, 0
      %s33 = sadd.s32 %s32, 1
      %s34 = scalar_select %p31, %s32, %s33
      %p37 = pneg %p31
      %p38 = scmp.eq.s32.totalorder %s22, 1
      %p39 = por %p37, %p38
      %p40 = scmp.ne.s32.totalorder %s32, %s35
      %p41 = scmp.eq.s32.totalorder %s22, 0
      %p42 = por %p40, %p41
      %p43 = scmp.ne.s32.totalorder %s32, %s35
      %p44 = scmp.eq.s32.totalorder %s27, 1
      %p45 = por %p43, %p44
      %p46 = scmp.ne.s32.totalorder %s35, %s36
      %p47 = scmp.eq.s32.totalorder %s27, 0
      %p48 = por %p46, %p47
      %p49 = scmp.ne.s32.totalorder %s35, %s36
      %p50 = scmp.eq.s32.totalorder %s28, 1
      %p51 = por %p49, %p50
      %p53 = scmp.ne.s32.totalorder %s36, %s52
      %p54 = scmp.eq.s32.totalorder %s28, 0
      %p55 = por %p53, %p54
      %s56 = ssub.s32 %s22, %s29
      %p57 = scmp.eq.s32.totalorder %s56, 0
      %s59 = sadd.s32 %s58, 1
      %s60 = scalar_select %p57, %s58, %s59
      %p63 = pneg %p57
      %p64 = scmp.eq.s32.totalorder %s22, 1
      %p65 = por %p63, %p64
      %p66 = scmp.ne.s32.totalorder %s58, %s61
      %p67 = scmp.eq.s32.totalorder %s22, 0
      %p68 = por %p66, %p67
      %p69 = scmp.ne.s32.totalorder %s58, %s61
      %p70 = scmp.eq.s32.totalorder %s27, 1
      %p71 = por %p69, %p70
      %p72 = scmp.ne.s32.totalorder %s61, %s62
      %p73 = scmp.eq.s32.totalorder %s27, 0
      %p74 = por %p72, %p73
      %p75 = scmp.ne.s32.totalorder %s61, %s62
      %p76 = scmp.eq.s32.totalorder %s28, 1
      %p77 = por %p75, %p76
      %p79 = scmp.ne.s32.totalorder %s62, %s78
      %p80 = scmp.eq.s32.totalorder %s28, 0
      %p81 = por %p79, %p80
      %s83 = sadd.s32 %s82, 1
      %p86 = scmp.eq.s32.totalorder %s22, 1
      %p87 = scmp.ne.s32.totalorder %s82, %s84
      %p88 = scmp.eq.s32.totalorder %s22, 0
      %p89 = por %p87, %p88
      %p90 = scmp.ne.s32.totalorder %s82, %s84
      %p91 = scmp.eq.s32.totalorder %s27, 1
      %p92 = por %p90, %p91
      %p93 = scmp.ne.s32.totalorder %s84, %s85
      %p94 = scmp.eq.s32.totalorder %s27, 0
      %p95 = por %p93, %p94
      %p96 = scmp.ne.s32.totalorder %s84, %s85
      %p97 = scmp.eq.s32.totalorder %s28, 1
      %p98 = por %p96, %p97
      %p100 = scmp.ne.s32.totalorder %s85, %s99
      %p101 = scmp.eq.s32.totalorder %s28, 0
      %p102 = por %p100, %p101
      %s104 = sadd.s32 %s103, 1
      %p107 = scmp.eq.s32.totalorder %s22, 1
      %p108 = scmp.ne.s32.totalorder %s103, %s105
      %p109 = scmp.eq.s32.totalorder %s22, 0
      %p110 = por %p108, %p109
      %p111 = scmp.ne.s32.totalorder %s103, %s105
      %p112 = scmp.eq.s32.totalorder %s27, 1
      %p113 = por %p111, %p112
      %p114 = scmp.ne.s32.totalorder %s105, %s106
      %p115 = scmp.eq.s32.totalorder %s27, 0
      %p116 = por %p114, %p115
      %p117 = scmp.ne.s32.totalorder %s105, %s106
      %p118 = scmp.eq.s32.totalorder %s28, 1
      %p119 = por %p117, %p118
      %p121 = scmp.ne.s32.totalorder %s106, %s120
      %p122 = scmp.eq.s32.totalorder %s28, 0
      %p123 = por %p121, %p122
      %s125 = sadd.s32 %s124, 1
      %p128 = scmp.eq.s32.totalorder %s22, 1
      %p129 = scmp.ne.s32.totalorder %s124, %s126
      %p130 = scmp.eq.s32.totalorder %s22, 0
      %p131 = por %p129, %p130
      %p132 = scmp.ne.s32.totalorder %s124, %s126
      %p133 = scmp.eq.s32.totalorder %s27, 1
      %p134 = por %p132, %p133
      %p135 = scmp.ne.s32.totalorder %s126, %s127
      %p136 = scmp.eq.s32.totalorder %s27, 0
      %p137 = por %p135, %p136
      %p138 = scmp.ne.s32.totalorder %s126, %s127
      %p139 = scmp.eq.s32.totalorder %s28, 1
      %p140 = por %p138, %p139
      %p142 = scmp.ne.s32.totalorder %s127, %s141
      %p143 = scmp.eq.s32.totalorder %s28, 0
      %p144 = por %p142, %p143
      %s146 = sadd.s32 %s145, 1
      %p149 = scmp.eq.s32.totalorder %s22, 1
      %p150 = scmp.ne.s32.totalorder %s145, %s147
      %p151 = scmp.eq.s32.totalorder %s22, 0
      %p152 = por %p150, %p151
      %p153 = scmp.ne.s32.totalorder %s145, %s147
      %p154 = scmp.eq.s32.totalorder %s27, 1
      %p155 = por %p153, %p154
      %p156 = scmp.ne.s32.totalorder %s147, %s148
      %p157 = scmp.eq.s32.totalorder %s27, 0
      %p158 = por %p156, %p157
      %p159 = scmp.ne.s32.totalorder %s147, %s148
      %p160 = scmp.eq.s32.totalorder %s28, 1
      %p161 = por %p159, %p160
      %p163 = scmp.ne.s32.totalorder %s148, %s162
      %p164 = scmp.eq.s32.totalorder %s28, 0
      %p165 = por %p163, %p164
      %s167 = sadd.s32 %s166, 1
      %p170 = scmp.eq.s32.totalorder %s22, 1
      %p171 = scmp.ne.s32.totalorder %s166, %s168
      %p172 = scmp.eq.s32.totalorder %s22, 0
      %p173 = por %p171, %p172
      %p174 = scmp.ne.s32.totalorder %s166, %s168
      %p175 = scmp.eq.s32.totalorder %s27, 1
      %p176 = por %p174, %p175
      %p177 = scmp.ne.s32.totalorder %s168, %s169
      %p178 = scmp.eq.s32.totalorder %s27, 0
      %p179 = por %p177, %p178
      %p180 = scmp.ne.s32.totalorder %s168, %s169
      %p181 = scmp.eq.s32.totalorder %s28, 1
      %p182 = por %p180, %p181
      %p184 = scmp.ne.s32.totalorder %s169, %s183
      %p185 = scmp.eq.s32.totalorder %s28, 0
      %p186 = por %p184, %p185
      %s188 = sadd.s32 %s187, 1
      %p191 = scmp.eq.s32.totalorder %s22, 1
      %p192 = scmp.ne.s32.totalorder %s187, %s189
      %p193 = scmp.eq.s32.totalorder %s22, 0
      %p194 = por %p192, %p193
      %p195 = scmp.ne.s32.totalorder %s187, %s189
      %p196 = scmp.eq.s32.totalorder %s27, 1
      %p197 = por %p195, %p196
      %p198 = scmp.ne.s32.totalorder %s189, %s190
      %p199 = scmp.eq.s32.totalorder %s27, 0
      %p200 = por %p198, %p199
      %p201 = scmp.ne.s32.totalorder %s189, %s190
      %p202 = scmp.eq.s32.totalorder %s28, 1
      %p203 = por %p201, %p202
      %p205 = scmp.ne.s32.totalorder %s190, %s204
      %p206 = scmp.eq.s32.totalorder %s28, 0
      %p207 = por %p205, %p206
      %s208 = ssub.s32 %s22, %s29
      %p209 = scmp.eq.s32.totalorder %s208, 0
      %s211 = sadd.s32 %s210, 1
      %s212 = scalar_select %p209, %s210, %s211
      %p215 = pneg %p209
      %p216 = scmp.eq.s32.totalorder %s22, 1
      %p217 = por %p215, %p216
      %p218 = scmp.ne.s32.totalorder %s210, %s213
      %p219 = scmp.eq.s32.totalorder %s22, 0
      %p220 = por %p218, %p219
      %p221 = scmp.ne.s32.totalorder %s210, %s213
      %p222 = scmp.eq.s32.totalorder %s27, 1
      %p223 = por %p221, %p222
      %p224 = scmp.ne.s32.totalorder %s213, %s214
      %p225 = scmp.eq.s32.totalorder %s27, 0
      %p226 = por %p224, %p225
      %p227 = scmp.ne.s32.totalorder %s213, %s214
      %p228 = scmp.eq.s32.totalorder %s28, 1
      %p229 = por %p227, %p228
      %p231 = scmp.ne.s32.totalorder %s214, %s230
      %p232 = scmp.eq.s32.totalorder %s28, 0
      %p233 = por %p231, %p232
      %s234 = ssub.s32 %s22, %s29
      %p235 = scmp.eq.s32.totalorder %s234, 0
      %s237 = sadd.s32 %s236, 1
      %s238 = scalar_select %p235, %s236, %s237
      %p241 = pneg %p235
      %p242 = scmp.eq.s32.totalorder %s22, 1
      %p243 = por %p241, %p242
      %p244 = scmp.ne.s32.totalorder %s236, %s239
      %p245 = scmp.eq.s32.totalorder %s22, 0
      %p246 = por %p244, %p245
      %p247 = scmp.ne.s32.totalorder %s236, %s239
      %p248 = scmp.eq.s32.totalorder %s27, 1
      %p249 = por %p247, %p248
      %p250 = scmp.ne.s32.totalorder %s239, %s240
      %p251 = scmp.eq.s32.totalorder %s27, 0
      %p252 = por %p250, %p251
      %p253 = scmp.ne.s32.totalorder %s239, %s240
      %p254 = scmp.eq.s32.totalorder %s28, 1
      %p255 = por %p253, %p254
      %p257 = scmp.ne.s32.totalorder %s240, %s256
      %p258 = scmp.eq.s32.totalorder %s28, 0
      %p259 = por %p257, %p258
      %p260 = scmp.le.s32.totalorder 1, %s22
      %p261 = scmp.lt.s32.totalorder %s22, 3
      %p262 = pnand %p260, %p261
      %p263 = pneg %p262
      // Predicated region
      $region9: #{tpu_custom_call.1} parent=5 // pred_check
        _
      $region10: #{tpu_custom_call.1} parent=5 // pred_check_branch
        %265 = sbr.rel (%p262) target = $region12
      $region11: #{tpu_custom_call.1} parent=5 // pred_region
        %s266 = ssub.s32 %s22, 1
        // Predicated region
        $region13: #{tpu_custom_call.1} parent=11 // pred_check
          %p267 = pneg %p95
        $region14: #{tpu_custom_call.1} parent=11 // pred_check_branch
          %269 = sbr.rel (%p267) target = $region16
        $region15: #{tpu_custom_call.1} parent=11 // pred_region
          _
        $region16: #{tpu_custom_call.1} parent=11 // pred_fallthru
          _
        // Predicated region
        $region17: #{tpu_custom_call.1} parent=11 // pred_check
          %p270 = pneg %p116
        $region18: #{tpu_custom_call.1} parent=11 // pred_check_branch
          %272 = sbr.rel (%p270) target = $region20
        $region19: #{tpu_custom_call.1} parent=11 // pred_region
          _
        $region20: #{tpu_custom_call.1} parent=11 // pred_fallthru
          _
        // Predicated region
        $region21: #{tpu_custom_call.1} parent=11 // pred_check
          %p273 = pneg %p137
        $region22: #{tpu_custom_call.1} parent=11 // pred_check_branch
          %275 = sbr.rel (%p273) target = $region24
        $region23: #{tpu_custom_call.1} parent=11 // pred_region
          _
        $region24: #{tpu_custom_call.1} parent=11 // pred_fallthru
          _
        // Predicated region
        $region25: #{tpu_custom_call.1} parent=11 // pred_check
          %p276 = pneg %p158
        $region26: #{tpu_custom_call.1} parent=11 // pred_check_branch
          %278 = sbr.rel (%p276) target = $region28
        $region27: #{tpu_custom_call.1} parent=11 // pred_region
          _
        $region28: #{tpu_custom_call.1} parent=11 // pred_fallthru
          _
        // Predicated region
        $region29: #{tpu_custom_call.1} parent=11 // pred_check
          %p279 = pneg %p179
        $region30: #{tpu_custom_call.1} parent=11 // pred_check_branch
          %281 = sbr.rel (%p279) target = $region32
        $region31: #{tpu_custom_call.1} parent=11 // pred_region
          _
        $region32: #{tpu_custom_call.1} parent=11 // pred_fallthru
          _
        // Predicated region
        $region33: #{tpu_custom_call.1} parent=11 // pred_check
          %p282 = pneg %p200
        $region34: #{tpu_custom_call.1} parent=11 // pred_check_branch
          %284 = sbr.rel (%p282) target = $region36
        $region35: #{tpu_custom_call.1} parent=11 // pred_region
          _
        $region36: #{tpu_custom_call.1} parent=11 // pred_fallthru
          _
      $region12: #{tpu_custom_call.1} parent=5 // pred_fallthru
        _
      %p285 = scmp.lt.s32.totalorder %s22, 2
      // Predicated region
      $region37: #{tpu_custom_call.1} parent=5 // pred_check
        %p286 = pneg %p285
      $region38: #{tpu_custom_call.1} parent=5 // pred_check_branch
        %288 = sbr.rel (%p286) target = $region40
      $region39: #{tpu_custom_call.1} parent=5 // pred_region
        // Predicated region
        $region41: #{tpu_custom_call.1} parent=39 // pred_check
          %p289 = pneg %p42
        $region42: #{tpu_custom_call.1} parent=39 // pred_check_branch
          %291 = sbr.rel (%p289) target = $region44
        $region43: #{tpu_custom_call.1} parent=39 // pred_region
          %p292 = scmp.lt.s32.totalorder %s22, 1
          %s293 = scalar_select %p292, %s22, 1
          %s294 = smul.addr %s293, 2
          %s295 = smul.addr %s294, 8
          %s296 = scalar_lea.vmem %s0, %s295
        $region44: #{tpu_custom_call.1} parent=39 // pred_fallthru
          _
        // Predicated region
        $region45: #{tpu_custom_call.1} parent=39 // pred_check
          %p297 = pneg %p68
        $region46: #{tpu_custom_call.1} parent=39 // pred_check_branch
          %299 = sbr.rel (%p297) target = $region48
        $region47: #{tpu_custom_call.1} parent=39 // pred_region
          %p300 = scmp.lt.s32.totalorder %s22, 1
          %s301 = scalar_select %p300, %s22, 1
          %s302 = smul.addr %s301, 2
          %s303 = smul.addr %s302, 8
          %s304 = scalar_lea.vmem %s1, %s303
        $region48: #{tpu_custom_call.1} parent=39 // pred_fallthru
          _
      $region40: #{tpu_custom_call.1} parent=5 // pred_fallthru
        _
      %p305 = scmp.le.s32.totalorder 1, %s22
      %p306 = scmp.lt.s32.totalorder %s22, 3
      %p307 = pnand %p305, %p306
      %p308 = pneg %p307
      // Predicated region
      $region49: #{tpu_custom_call.1} parent=5 // pred_check
        _
      $region50: #{tpu_custom_call.1} parent=5 // pred_check_branch
        %310 = sbr.rel (%p307) target = $region52
      $region51: #{tpu_custom_call.1} parent=5 // pred_region
        %s311 = ssub.s32 %s22, 1
        %p312 = scmp.lt.s32.totalorder %s27, 1
        %s313 = scalar_select %p312, %s27, 1
        %s314 = smul.addr %s313, 2
        %s315 = smul.addr %s314, 8
        %s316 = scalar_lea.vmem %s0, %s315
        %p317 = pneg %p48
        %p318 = pneg %p45
        %p319 = scmp.lt.s32.totalorder %s27, 1
        %s320 = scalar_select %p319, %s27, 1
        %s321 = smul.addr %s320, 2
        %s322 = smul.addr %s321, 8
        %s323 = scalar_lea.vmem %s1, %s322
        %p324 = pneg %p74
        %p325 = pneg %p71
        %p326 = pneg %p95
        %p327 = pneg %p92
        %p328 = pneg %p116
        %p329 = pneg %p113
        %p330 = pneg %p137
        %p331 = pneg %p134
        %p332 = pneg %p158
        %p333 = pneg %p155
        %p334 = pneg %p179
        %p335 = pneg %p176
        %p336 = pneg %p200
        %p337 = pneg %p197
        %p338 = pneg %p226
        %p339 = pneg %p223
        %s340 = sand.u32 %s213, 1
        %s341 = scalar_lea.sflag [#allocation4], %s340
        %s342 = sand.u32 %s213, 1
        %s343 = smul.addr %s342, 16
        %s344 = scalar_lea.vmem [#allocation3], %s343
        %p345 = pneg %p252
        %p346 = pneg %p249
        %s347 = sand.u32 %s239, 1
        %s348 = scalar_lea.sflag [#allocation6], %s347
        %s349 = sand.u32 %s239, 1
        %s350 = smul.addr %s349, 16
        %s351 = scalar_lea.vmem [#allocation5], %s350
        %p352 = scmp.lt.s32.totalorder %s27, 1
        %s353 = scalar_select %p352, %s27, 1
        %s354 = smul.addr %s353, 2
        %s355 = smul.addr %s354, 8
        %s356 = scalar_lea.vmem %s0, %s355
        %p357 = scmp.lt.s32.totalorder %s27, 1
        %s358 = scalar_select %p357, %s27, 1
        %s359 = smul.addr %s358, 2
        %s360 = smul.addr %s359, 8
        %s361 = scalar_lea.vmem %s1, %s360
        %v363 = vld [vmem:[%s361] sm:$0xff]
        %v364 = vld [vmem:[%s361 + $0x8] sm:$0xff]
        %366 = vset.pattern.permute.xlu0 0
        %367 = vperm.xlu0 %366, %v363
        %v368 = vpop.permute.xlu0 %367
        %371 = vset.pattern.permute.xlu0 0
        %372 = vperm.xlu0 %371, %v364
        %v373 = vpop.permute.xlu0 %372
        %v375 = vlaneseq
        %v376 = vshrl.u32 %v375, 7
        %v377 = vadd.s32 %v376, 8
        %v378 = vld [vmem:[%s356] sm:$0xff]
        %v379 = vld [vmem:[%s356 + $0x8] sm:$0xff]
        %vm380 = vcmask 261120
        %381 = vst.msk [vmem:[#allocation2] sm:$0xff] %vm380, %v378
        %382 = vst.msk [vmem:[#allocation2 + $0x8] sm:$0xff] %vm380, %v379
        %v383 = vld [vmem:[#allocation2] sm:$0xff]
        %v384 = vld [vmem:[#allocation2 + $0x8] sm:$0xff]
        %vm385 = vcmp.ge.s32.totalorder %v376, 1
        %vm386 = vcmp.ge.s32.totalorder %v377, 1
        %v387 = vrot.slane %v383, 7
        %v388 = vrot.slane %v384, 7
        %vm389 = vcmp.lt.s32.totalorder %v376, 1
        %v390 = vsel %vm389, %v387, %v388
        %v391 = vsel %vm389, %v388, %v387
        %v392 = vsel %vm385, 1, 0
        %v393 = vsel %vm386, 1, 0
        %vm394 = vcmp.eq.s32.totalorder %v392, 1
        %vm395 = vcmp.eq.s32.totalorder %v393, 1
        %v396 = vsel %vm394, %v391, 0.0
        %v397 = vsel %vm395, %v390, 0.0
        %vm398 = vcmp.lt.s32.totalorder %v376, 15
        %vm399 = vcmp.lt.s32.totalorder %v377, 15
        %v400 = vrot.slane %v383, 1
        %v401 = vrot.slane %v384, 1
        %vm402 = vcmp.lt.s32.totalorder %v376, 7
        %v403 = vsel %vm402, %v400, %v401
        %v404 = vsel %vm402, %v401, %v400
        %v405 = vsel %vm398, 1, 0
        %v406 = vsel %vm399, 1, 0
        %vm407 = vcmp.eq.s32.totalorder %v405, 1
        %vm408 = vcmp.eq.s32.totalorder %v406, 1
        %v409 = vsel %vm407, %v403, 0.0
        %v410 = vsel %vm408, %v404, 0.0
        %413 = vrot.lane.b32.xlu0 %v383, 32
        %v414 = vpop.permute.xlu0 %413
        %415 = vrot.lane.b32.xlu0 %v384, 32
        %v416 = vpop.permute.xlu0 %415
        %421 = vrot.lane.b32.xlu0 %v409, 64
        %v422 = vpop.permute.xlu0 %421
        %423 = vrot.lane.b32.xlu0 %v410, 64
        %v424 = vpop.permute.xlu0 %423
        %v427 = vsel %vm380, %v396, %v414
        %v428 = vsel %vm380, %v397, %v416
        %vm429 = vcmask 523264
        %v430 = vsel %vm429, %v427, %v422
        %v431 = vsel %vm429, %v428, %v424
        %v432 = vpack.c.bf16 %v431, %v430
        %v433 = vld [vmem:[%s2] sm:$0xf]
        %v434 = vld [vmem:[%s2 + $0x4] sm:$0xf]
        %v435 = vld [vmem:[%s2 + $0x8] sm:$0xf]
        %v436 = vld [vmem:[%s2 + $0xc] sm:$0xf]
        %v437 = vld [vmem:[%s2 + $0x10] sm:$0xf]
        %v438 = vld [vmem:[%s2 + $0x14] sm:$0xf]
        %v439 = vld [vmem:[%s2 + $0x18] sm:$0xf]
        %v440 = vld [vmem:[%s2 + $0x1c] sm:$0xf]
        %v441 = vld [vmem:[%s2 + $0x20] sm:$0xf]
        %v442 = vld [vmem:[%s2 + $0x24] sm:$0xf]
        %v443 = vld [vmem:[%s2 + $0x28] sm:$0xf]
        %v444 = vld [vmem:[%s2 + $0x2c] sm:$0xf]
        %v445 = vld [vmem:[%s3] sm:$0x1]
        %v447 = vlaneseq
        %v448 = vshrl.u32 %v447, 7
        %v449 = vsub.s32 0, %v448
        %v450 = vrot.slane %v445, %v449
        %v464 = vunpack.c.l.b16 %v433
        %v465 = vunpack.c.l.b16 %v434
        %v466 = vunpack.c.l.b16 %v435
        %v467 = vunpack.c.l.b16 %v436
        %v468 = vunpack.c.l.b16 %v437
        %v469 = vunpack.c.l.b16 %v438
        %v470 = vunpack.c.l.b16 %v439
        %v471 = vunpack.c.l.b16 %v440
        %v472 = vunpack.c.l.b16 %v441
        %v473 = vunpack.c.l.b16 %v442
        %v474 = vunpack.c.l.b16 %v443
        %v475 = vunpack.c.l.b16 %v444
        %v476 = vpack.c.b16 %v465, %v464
        %v477 = vpack.c.b16 %v467, %v466
        %v478 = vpack.c.b16 %v469, %v468
        %v479 = vpack.c.b16 %v471, %v470
        %v480 = vpack.c.b16 %v473, %v472
        %v481 = vpack.c.b16 %v475, %v474
        %vm488 = vcmask 785408
        %v490 = vsel %vm488, %v432, 0
        %492 = vmatprep.subr.bf16.mxu0 0
        %493 = vmatpush1.bf16.msra.mxu0 0
        %494 = vmatprep.subr.bf16.mxu0 0
        %495 = vmatpush1.bf16.msra.mxu0 0
        %496 = vmatprep.subr.bf16.mxu0 0
        %497 = vmatpush1.bf16.msra.mxu0 %v481
        %498 = vmatprep.subr.bf16.mxu0 0
        %499 = vmatpush1.bf16.msra.mxu0 %v480
        %500 = vmatprep.subr.bf16.mxu0 0
        %501 = vmatpush1.bf16.msra.mxu0 %v479
        %502 = vmatprep.subr.bf16.mxu0 0
        %503 = vmatpush1.bf16.msra.mxu0 %v478
        %504 = vmatprep.subr.bf16.mxu0 0
        %505 = vmatpush1.bf16.msra.mxu0 %v477
        %506 = vmatprep.subr.bf16.mxu0 0
        %507 = vmatpush1.bf16.msra.mxu0 %v476
        %508 = vmatprep.subr.bf16.mxu0 0
        %509 = vmatpush2.bf16.msra.mxu0 0
        %510 = vmatprep.subr.bf16.mxu0 0
        %511 = vmatpush2.bf16.msra.mxu0 0
        %512 = vmatprep.subr.bf16.mxu0 0
        %513 = vmatpush2.bf16.msra.mxu0 0
        %514 = vmatprep.subr.bf16.mxu0 0
        %515 = vmatpush2.bf16.msra.mxu0 0
        %516 = vmatprep.subr.bf16.mxu0 0
        %517 = vmatpush2.bf16.msra.mxu0 0
        %518 = vmatprep.subr.bf16.mxu0 0
        %519 = vmatpush2.bf16.msra.mxu0 0
        %520 = vmatprep.subr.bf16.mxu0 0
        %521 = vmatpush2.bf16.msra.mxu0 0
        %522 = vmatprep.subr.bf16.mxu0 0
        %523 = vmatpush2.bf16.msra.mxu0 0
        %524 = vmatprep.mubr.bf16.mxu0 0
        %525 = vmatmul.mubr.bf16.gmra.mxu0 %v490
        %v526 = vpop.f32.mrf.mxu0
        %v527 = vadd.f32 %v450, %v526
        %v528 = vpop.f32.mrf.mxu0
        %v529 = vpop.f32.mrf.mxu0
        %v530 = vadd.f32 %v450, %v529
        %v531 = vpop.f32.mrf.mxu0
        %532 = vdwg.mxu0
        %v533 = vmax.f32 %v527, 0.0
        %v534 = vmax.f32 %v530, 0.0
        %v535 = vpack.c.bf16 %v534, %v533
        %v536 = vld [vmem:[%s4] sm:$0xf]
        %v537 = vld [vmem:[%s4 + $0x4] sm:$0xf]
        %v538 = vld [vmem:[%s4 + $0x8] sm:$0xf]
        %v539 = vld [vmem:[%s4 + $0xc] sm:$0xf]
        %v540 = vld [vmem:[%s5] sm:$0x1]
        %v542 = vlaneseq
        %v543 = vshrl.u32 %v542, 7
        %v544 = vsub.s32 0, %v543
        %v545 = vrot.slane %v540, %v544
        %v551 = vunpack.c.l.b16 %v536
        %v552 = vunpack.c.l.b16 %v537
        %v553 = vunpack.c.l.b16 %v538
        %v554 = vunpack.c.l.b16 %v539
        %v555 = vpack.c.b16 %v552, %v551
        %v556 = vpack.c.b16 %v554, %v553
        %v560 = vsel %vm380, %v535, 0
        %562 = vmatprep.subr.bf16.mxu0 0
        %563 = vmatpush1.bf16.msra.mxu0 0
        %564 = vmatprep.subr.bf16.mxu0 0
        %565 = vmatpush1.bf16.msra.mxu0 0
        %566 = vmatprep.subr.bf16.mxu0 0
        %567 = vmatpush1.bf16.msra.mxu0 0
        %568 = vmatprep.subr.bf16.mxu0 0
        %569 = vmatpush1.bf16.msra.mxu0 0
        %570 = vmatprep.subr.bf16.mxu0 0
        %571 = vmatpush1.bf16.msra.mxu0 0
        %572 = vmatprep.subr.bf16.mxu0 0
        %573 = vmatpush1.bf16.msra.mxu0 0
        %574 = vmatprep.subr.bf16.mxu0 0
        %575 = vmatpush1.bf16.msra.mxu0 %v556
        %576 = vmatprep.subr.bf16.mxu0 0
        %577 = vmatpush1.bf16.msra.mxu0 %v555
        %578 = vmatprep.subr.bf16.mxu0 0
        %579 = vmatpush2.bf16.msra.mxu0 0
        %580 = vmatprep.subr.bf16.mxu0 0
        %581 = vmatpush2.bf16.msra.mxu0 0
        %582 = vmatprep.subr.bf16.mxu0 0
        %583 = vmatpush2.bf16.msra.mxu0 0
        %584 = vmatprep.subr.bf16.mxu0 0
        %585 = vmatpush2.bf16.msra.mxu0 0
        %586 = vmatprep.subr.bf16.mxu0 0
        %587 = vmatpush2.bf16.msra.mxu0 0
        %588 = vmatprep.subr.bf16.mxu0 0
        %589 = vmatpush2.bf16.msra.mxu0 0
        %590 = vmatprep.subr.bf16.mxu0 0
        %591 = vmatpush2.bf16.msra.mxu0 0
        %592 = vmatprep.subr.bf16.mxu0 0
        %593 = vmatpush2.bf16.msra.mxu0 0
        %594 = vmatprep.mubr.bf16.mxu0 0
        %595 = vmatmul.mubr.bf16.gmra.mxu0 %v560
        %v596 = vpop.f32.mrf.mxu0
        %v597 = vadd.f32 %v545, %v596
        %v598 = vpop.f32.mrf.mxu0
        %v599 = vpop.f32.mrf.mxu0
        %v600 = vadd.f32 %v545, %v599
        %v601 = vpop.f32.mrf.mxu0
        %602 = vdwg.mxu0
        %v603 = vadd.f32 %v383, %v597
        %v604 = vadd.f32 %v384, %v600
        %v605 = vmul.f32 %v603, %v368
        %v606 = vmul.f32 %v604, %v373
        %607 = vst.msk [vmem:[#allocation2] sm:$0xff] %vm380, %v605
        %608 = vst.msk [vmem:[#allocation2 + $0x8] sm:$0xff] %vm380, %v606
        %v609 = vld [vmem:[#allocation2] sm:$0xff]
        %v610 = vld [vmem:[#allocation2 + $0x8] sm:$0xff]
        %vm611 = vcmp.ge.s32.totalorder %v376, 2
        %vm612 = vcmp.ge.s32.totalorder %v377, 2
        %v613 = vrot.slane %v609, 6
        %v614 = vrot.slane %v610, 6
        %vm615 = vcmp.lt.s32.totalorder %v376, 2
        %v616 = vsel %vm615, %v613, %v614
        %v617 = vsel %vm615, %v614, %v613
        %v618 = vsel %vm611, 1, 0
        %v619 = vsel %vm612, 1, 0
        %vm620 = vcmp.eq.s32.totalorder %v618, 1
        %vm621 = vcmp.eq.s32.totalorder %v619, 1
        %v622 = vsel %vm620, %v617, 0.0
        %v623 = vsel %vm621, %v616, 0.0
        %vm624 = vcmp.lt.s32.totalorder %v376, 14
        %vm625 = vcmp.lt.s32.totalorder %v377, 14
        %v626 = vrot.slane %v609, 2
        %v627 = vrot.slane %v610, 2
        %vm628 = vcmp.lt.s32.totalorder %v376, 6
        %v629 = vsel %vm628, %v626, %v627
        %v630 = vsel %vm628, %v627, %v626
        %v631 = vsel %vm624, 1, 0
        %v632 = vsel %vm625, 1, 0
        %vm633 = vcmp.eq.s32.totalorder %v631, 1
        %vm634 = vcmp.eq.s32.totalorder %v632, 1
        %v635 = vsel %vm633, %v629, 0.0
        %v636 = vsel %vm634, %v630, 0.0
        %639 = vrot.lane.b32.xlu0 %v609, 32
        %v640 = vpop.permute.xlu0 %639
        %641 = vrot.lane.b32.xlu0 %v610, 32
        %v642 = vpop.permute.xlu0 %641
        %647 = vrot.lane.b32.xlu0 %v635, 64
        %v648 = vpop.permute.xlu0 %647
        %649 = vrot.lane.b32.xlu0 %v636, 64
        %v650 = vpop.permute.xlu0 %649
        %v653 = vsel %vm380, %v622, %v640
        %v654 = vsel %vm380, %v623, %v642
        %v655 = vsel %vm429, %v653, %v648
        %v656 = vsel %vm429, %v654, %v650
        %v657 = vpack.c.bf16 %v656, %v655
        %s658 = scalar_lea.vmem %s2, 48
        %v659 = vld [vmem:[%s658] sm:$0xf]
        %v660 = vld [vmem:[%s658 + $0x4] sm:$0xf]
        %v661 = vld [vmem:[%s658 + $0x8] sm:$0xf]
        %v662 = vld [vmem:[%s658 + $0xc] sm:$0xf]
        %v663 = vld [vmem:[%s658 + $0x10] sm:$0xf]
        %v664 = vld [vmem:[%s658 + $0x14] sm:$0xf]
        %v665 = vld [vmem:[%s658 + $0x18] sm:$0xf]
        %v666 = vld [vmem:[%s658 + $0x1c] sm:$0xf]
        %v667 = vld [vmem:[%s658 + $0x20] sm:$0xf]
        %v668 = vld [vmem:[%s658 + $0x24] sm:$0xf]
        %v669 = vld [vmem:[%s658 + $0x28] sm:$0xf]
        %v670 = vld [vmem:[%s658 + $0x2c] sm:$0xf]
        %s671 = scalar_lea.vmem %s3, 1
        %v672 = vld [vmem:[%s671] sm:$0x1]
        %v674 = vlaneseq
        %v675 = vshrl.u32 %v674, 7
        %v676 = vsub.s32 0, %v675
        %v677 = vrot.slane %v672, %v676
        %v691 = vunpack.c.l.b16 %v659
        %v692 = vunpack.c.l.b16 %v660
        %v693 = vunpack.c.l.b16 %v661
        %v694 = vunpack.c.l.b16 %v662
        %v695 = vunpack.c.l.b16 %v663
        %v696 = vunpack.c.l.b16 %v664
        %v697 = vunpack.c.l.b16 %v665
        %v698 = vunpack.c.l.b16 %v666
        %v699 = vunpack.c.l.b16 %v667
        %v700 = vunpack.c.l.b16 %v668
        %v701 = vunpack.c.l.b16 %v669
        %v702 = vunpack.c.l.b16 %v670
        %v703 = vpack.c.b16 %v692, %v691
        %v704 = vpack.c.b16 %v694, %v693
        %v705 = vpack.c.b16 %v696, %v695
        %v706 = vpack.c.b16 %v698, %v697
        %v707 = vpack.c.b16 %v700, %v699
        %v708 = vpack.c.b16 %v702, %v701
        %v716 = vsel %vm488, %v657, 0
        %718 = vmatprep.subr.bf16.mxu0 0
        %719 = vmatpush1.bf16.msra.mxu0 0
        %720 = vmatprep.subr.bf16.mxu0 0
        %721 = vmatpush1.bf16.msra.mxu0 0
        %722 = vmatprep.subr.bf16.mxu0 0
        %723 = vmatpush1.bf16.msra.mxu0 %v708
        %724 = vmatprep.subr.bf16.mxu0 0
        %725 = vmatpush1.bf16.msra.mxu0 %v707
        %726 = vmatprep.subr.bf16.mxu0 0
        %727 = vmatpush1.bf16.msra.mxu0 %v706
        %728 = vmatprep.subr.bf16.mxu0 0
        %729 = vmatpush1.bf16.msra.mxu0 %v705
        %730 = vmatprep.subr.bf16.mxu0 0
        %731 = vmatpush1.bf16.msra.mxu0 %v704
        %732 = vmatprep.subr.bf16.mxu0 0
        %733 = vmatpush1.bf16.msra.mxu0 %v703
        %734 = vmatprep.subr.bf16.mxu0 0
        %735 = vmatpush2.bf16.msra.mxu0 0
        %736 = vmatprep.subr.bf16.mxu0 0
        %737 = vmatpush2.bf16.msra.mxu0 0
        %738 = vmatprep.subr.bf16.mxu0 0
        %739 = vmatpush2.bf16.msra.mxu0 0
        %740 = vmatprep.subr.bf16.mxu0 0
        %741 = vmatpush2.bf16.msra.mxu0 0
        %742 = vmatprep.subr.bf16.mxu0 0
        %743 = vmatpush2.bf16.msra.mxu0 0
        %744 = vmatprep.subr.bf16.mxu0 0
        %745 = vmatpush2.bf16.msra.mxu0 0
        %746 = vmatprep.subr.bf16.mxu0 0
        %747 = vmatpush2.bf16.msra.mxu0 0
        %748 = vmatprep.subr.bf16.mxu0 0
        %749 = vmatpush2.bf16.msra.mxu0 0
        %750 = vmatprep.mubr.bf16.mxu0 0
        %751 = vmatmul.mubr.bf16.gmra.mxu0 %v716
        %v752 = vpop.f32.mrf.mxu0
        %v753 = vadd.f32 %v677, %v752
        %v754 = vpop.f32.mrf.mxu0
        %v755 = vpop.f32.mrf.mxu0
        %v756 = vadd.f32 %v677, %v755
        %v757 = vpop.f32.mrf.mxu0
        %758 = vdwg.mxu0
        %v759 = vmax.f32 %v753, 0.0
        %v760 = vmax.f32 %v756, 0.0
        %v761 = vpack.c.bf16 %v760, %v759
        %s762 = scalar_lea.vmem %s4, 16
        %v763 = vld [vmem:[%s762] sm:$0xf]
        %v764 = vld [vmem:[%s762 + $0x4] sm:$0xf]
        %v765 = vld [vmem:[%s762 + $0x8] sm:$0xf]
        %v766 = vld [vmem:[%s762 + $0xc] sm:$0xf]
        %s767 = scalar_lea.vmem %s5, 1
        %v768 = vld [vmem:[%s767] sm:$0x1]
        %v770 = vlaneseq
        %v771 = vshrl.u32 %v770, 7
        %v772 = vsub.s32 0, %v771
        %v773 = vrot.slane %v768, %v772
        %v779 = vunpack.c.l.b16 %v763
        %v780 = vunpack.c.l.b16 %v764
        %v781 = vunpack.c.l.b16 %v765
        %v782 = vunpack.c.l.b16 %v766
        %v783 = vpack.c.b16 %v780, %v779
        %v784 = vpack.c.b16 %v782, %v781
        %v788 = vsel %vm380, %v761, 0
        %790 = vmatprep.subr.bf16.mxu0 0
        %791 = vmatpush1.bf16.msra.mxu0 0
        %792 = vmatprep.subr.bf16.mxu0 0
        %793 = vmatpush1.bf16.msra.mxu0 0
        %794 = vmatprep.subr.bf16.mxu0 0
        %795 = vmatpush1.bf16.msra.mxu0 0
        %796 = vmatprep.subr.bf16.mxu0 0
        %797 = vmatpush1.bf16.msra.mxu0 0
        %798 = vmatprep.subr.bf16.mxu0 0
        %799 = vmatpush1.bf16.msra.mxu0 0
        %800 = vmatprep.subr.bf16.mxu0 0
        %801 = vmatpush1.bf16.msra.mxu0 0
        %802 = vmatprep.subr.bf16.mxu0 0
        %803 = vmatpush1.bf16.msra.mxu0 %v784
        %804 = vmatprep.subr.bf16.mxu0 0
        %805 = vmatpush1.bf16.msra.mxu0 %v783
        %806 = vmatprep.subr.bf16.mxu0 0
        %807 = vmatpush2.bf16.msra.mxu0 0
        %808 = vmatprep.subr.bf16.mxu0 0
        %809 = vmatpush2.bf16.msra.mxu0 0
        %810 = vmatprep.subr.bf16.mxu0 0
        %811 = vmatpush2.bf16.msra.mxu0 0
        %812 = vmatprep.subr.bf16.mxu0 0
        %813 = vmatpush2.bf16.msra.mxu0 0
        %814 = vmatprep.subr.bf16.mxu0 0
        %815 = vmatpush2.bf16.msra.mxu0 0
        %816 = vmatprep.subr.bf16.mxu0 0
        %817 = vmatpush2.bf16.msra.mxu0 0
        %818 = vmatprep.subr.bf16.mxu0 0
        %819 = vmatpush2.bf16.msra.mxu0 0
        %820 = vmatprep.subr.bf16.mxu0 0
        %821 = vmatpush2.bf16.msra.mxu0 0
        %822 = vmatprep.mubr.bf16.mxu0 0
        %823 = vmatmul.mubr.bf16.gmra.mxu0 %v788
        %v824 = vpop.f32.mrf.mxu0
        %v825 = vadd.f32 %v773, %v824
        %v826 = vpop.f32.mrf.mxu0
        %v827 = vpop.f32.mrf.mxu0
        %v828 = vadd.f32 %v773, %v827
        %v829 = vpop.f32.mrf.mxu0
        %830 = vdwg.mxu0
        %v831 = vadd.f32 %v609, %v825
        %v832 = vadd.f32 %v610, %v828
        %v833 = vmul.f32 %v831, %v368
        %v834 = vmul.f32 %v832, %v373
        %835 = vst.msk [vmem:[#allocation2] sm:$0xff] %vm380, %v833
        %836 = vst.msk [vmem:[#allocation2 + $0x8] sm:$0xff] %vm380, %v834
        %v837 = vld [vmem:[#allocation2] sm:$0xff]
        %v838 = vld [vmem:[#allocation2 + $0x8] sm:$0xff]
        %vm839 = vcmp.ge.s32.totalorder %v376, 4
        %vm840 = vcmp.ge.s32.totalorder %v377, 4
        %v841 = vrot.slane %v837, 4
        %v842 = vrot.slane %v838, 4
        %vm843 = vcmp.lt.s32.totalorder %v376, 4
        %v844 = vsel %vm843, %v841, %v842
        %v845 = vsel %vm843, %v842, %v841
        %v846 = vsel %vm839, 1, 0
        %v847 = vsel %vm840, 1, 0
        %vm848 = vcmp.eq.s32.totalorder %v846, 1
        %vm849 = vcmp.eq.s32.totalorder %v847, 1
        %v850 = vsel %vm848, %v845, 0.0
        %v851 = vsel %vm849, %v844, 0.0
        %vm852 = vcmp.lt.s32.totalorder %v376, 12
        %vm853 = vcmp.lt.s32.totalorder %v377, 12
        %v854 = vsel %vm852, 1, 0
        %v855 = vsel %vm853, 1, 0
        %vm856 = vcmp.eq.s32.totalorder %v854, 1
        %vm857 = vcmp.eq.s32.totalorder %v855, 1
        %v858 = vsel %vm856, %v844, 0.0
        %v859 = vsel %vm857, %v845, 0.0
        %862 = vrot.lane.b32.xlu0 %v837, 32
        %v863 = vpop.permute.xlu0 %862
        %864 = vrot.lane.b32.xlu0 %v838, 32
        %v865 = vpop.permute.xlu0 %864
        %870 = vrot.lane.b32.xlu0 %v858, 64
        %v871 = vpop.permute.xlu0 %870
        %872 = vrot.lane.b32.xlu0 %v859, 64
        %v873 = vpop.permute.xlu0 %872
        %v876 = vsel %vm380, %v850, %v863
        %v877 = vsel %vm380, %v851, %v865
        %v878 = vsel %vm429, %v876, %v871
        %v879 = vsel %vm429, %v877, %v873
        %v880 = vpack.c.bf16 %v879, %v878
        %s881 = scalar_lea.vmem %s2, 96
        %v882 = vld [vmem:[%s881] sm:$0xf]
        %v883 = vld [vmem:[%s881 + $0x4] sm:$0xf]
        %v884 = vld [vmem:[%s881 + $0x8] sm:$0xf]
        %v885 = vld [vmem:[%s881 + $0xc] sm:$0xf]
        %v886 = vld [vmem:[%s881 + $0x10] sm:$0xf]
        %v887 = vld [vmem:[%s881 + $0x14] sm:$0xf]
        %v888 = vld [vmem:[%s881 + $0x18] sm:$0xf]
        %v889 = vld [vmem:[%s881 + $0x1c] sm:$0xf]
        %v890 = vld [vmem:[%s881 + $0x20] sm:$0xf]
        %v891 = vld [vmem:[%s881 + $0x24] sm:$0xf]
        %v892 = vld [vmem:[%s881 + $0x28] sm:$0xf]
        %v893 = vld [vmem:[%s881 + $0x2c] sm:$0xf]
        %s894 = scalar_lea.vmem %s3, 2
        %v895 = vld [vmem:[%s894] sm:$0x1]
        %v897 = vlaneseq
        %v898 = vshrl.u32 %v897, 7
        %v899 = vsub.s32 0, %v898
        %v900 = vrot.slane %v895, %v899
        %v914 = vunpack.c.l.b16 %v882
        %v915 = vunpack.c.l.b16 %v883
        %v916 = vunpack.c.l.b16 %v884
        %v917 = vunpack.c.l.b16 %v885
        %v918 = vunpack.c.l.b16 %v886
        %v919 = vunpack.c.l.b16 %v887
        %v920 = vunpack.c.l.b16 %v888
        %v921 = vunpack.c.l.b16 %v889
        %v922 = vunpack.c.l.b16 %v890
        %v923 = vunpack.c.l.b16 %v891
        %v924 = vunpack.c.l.b16 %v892
        %v925 = vunpack.c.l.b16 %v893
        %v926 = vpack.c.b16 %v915, %v914
        %v927 = vpack.c.b16 %v917, %v916
        %v928 = vpack.c.b16 %v919, %v918
        %v929 = vpack.c.b16 %v921, %v920
        %v930 = vpack.c.b16 %v923, %v922
        %v931 = vpack.c.b16 %v925, %v924
        %v939 = vsel %vm488, %v880, 0
        %941 = vmatprep.subr.bf16.mxu0 0
        %942 = vmatpush1.bf16.msra.mxu0 0
        %943 = vmatprep.subr.bf16.mxu0 0
        %944 = vmatpush1.bf16.msra.mxu0 0
        %945 = vmatprep.subr.bf16.mxu0 0
        %946 = vmatpush1.bf16.msra.mxu0 %v931
        %947 = vmatprep.subr.bf16.mxu0 0
        %948 = vmatpush1.bf16.msra.mxu0 %v930
        %949 = vmatprep.subr.bf16.mxu0 0
        %950 = vmatpush1.bf16.msra.mxu0 %v929
        %951 = vmatprep.subr.bf16.mxu0 0
        %952 = vmatpush1.bf16.msra.mxu0 %v928
        %953 = vmatprep.subr.bf16.mxu0 0
        %954 = vmatpush1.bf16.msra.mxu0 %v927
        %955 = vmatprep.subr.bf16.mxu0 0
        %956 = vmatpush1.bf16.msra.mxu0 %v926
        %957 = vmatprep.subr.bf16.mxu0 0
        %958 = vmatpush2.bf16.msra.mxu0 0
        %959 = vmatprep.subr.bf16.mxu0 0
        %960 = vmatpush2.bf16.msra.mxu0 0
        %961 = vmatprep.subr.bf16.mxu0 0
        %962 = vmatpush2.bf16.msra.mxu0 0
        %963 = vmatprep.subr.bf16.mxu0 0
        %964 = vmatpush2.bf16.msra.mxu0 0
        %965 = vmatprep.subr.bf16.mxu0 0
        %966 = vmatpush2.bf16.msra.mxu0 0
        %967 = vmatprep.subr.bf16.mxu0 0
        %968 = vmatpush2.bf16.msra.mxu0 0
        %969 = vmatprep.subr.bf16.mxu0 0
        %970 = vmatpush2.bf16.msra.mxu0 0
        %971 = vmatprep.subr.bf16.mxu0 0
        %972 = vmatpush2.bf16.msra.mxu0 0
        %973 = vmatprep.mubr.bf16.mxu0 0
        %974 = vmatmul.mubr.bf16.gmra.mxu0 %v939
        %v975 = vpop.f32.mrf.mxu0
        %v976 = vadd.f32 %v900, %v975
        %v977 = vpop.f32.mrf.mxu0
        %v978 = vpop.f32.mrf.mxu0
        %v979 = vadd.f32 %v900, %v978
        %v980 = vpop.f32.mrf.mxu0
        %981 = vdwg.mxu0
        %v982 = vmax.f32 %v976, 0.0
        %v983 = vmax.f32 %v979, 0.0
        %v984 = vpack.c.bf16 %v983, %v982
        %s985 = scalar_lea.vmem %s4, 32
        %v986 = vld [vmem:[%s985] sm:$0xf]
        %v987 = vld [vmem:[%s985 + $0x4] sm:$0xf]
        %v988 = vld [vmem:[%s985 + $0x8] sm:$0xf]
        %v989 = vld [vmem:[%s985 + $0xc] sm:$0xf]
        %s990 = scalar_lea.vmem %s5, 2
        %v991 = vld [vmem:[%s990] sm:$0x1]
        %v993 = vlaneseq
        %v994 = vshrl.u32 %v993, 7
        %v995 = vsub.s32 0, %v994
        %v996 = vrot.slane %v991, %v995
        %v1002 = vunpack.c.l.b16 %v986
        %v1003 = vunpack.c.l.b16 %v987
        %v1004 = vunpack.c.l.b16 %v988
        %v1005 = vunpack.c.l.b16 %v989
        %v1006 = vpack.c.b16 %v1003, %v1002
        %v1007 = vpack.c.b16 %v1005, %v1004
        %v1011 = vsel %vm380, %v984, 0
        %1013 = vmatprep.subr.bf16.mxu0 0
        %1014 = vmatpush1.bf16.msra.mxu0 0
        %1015 = vmatprep.subr.bf16.mxu0 0
        %1016 = vmatpush1.bf16.msra.mxu0 0
        %1017 = vmatprep.subr.bf16.mxu0 0
        %1018 = vmatpush1.bf16.msra.mxu0 0
        %1019 = vmatprep.subr.bf16.mxu0 0
        %1020 = vmatpush1.bf16.msra.mxu0 0
        %1021 = vmatprep.subr.bf16.mxu0 0
        %1022 = vmatpush1.bf16.msra.mxu0 0
        %1023 = vmatprep.subr.bf16.mxu0 0
        %1024 = vmatpush1.bf16.msra.mxu0 0
        %1025 = vmatprep.subr.bf16.mxu0 0
        %1026 = vmatpush1.bf16.msra.mxu0 %v1007
        %1027 = vmatprep.subr.bf16.mxu0 0
        %1028 = vmatpush1.bf16.msra.mxu0 %v1006
        %1029 = vmatprep.subr.bf16.mxu0 0
        %1030 = vmatpush2.bf16.msra.mxu0 0
        %1031 = vmatprep.subr.bf16.mxu0 0
        %1032 = vmatpush2.bf16.msra.mxu0 0
        %1033 = vmatprep.subr.bf16.mxu0 0
        %1034 = vmatpush2.bf16.msra.mxu0 0
        %1035 = vmatprep.subr.bf16.mxu0 0
        %1036 = vmatpush2.bf16.msra.mxu0 0
        %1037 = vmatprep.subr.bf16.mxu0 0
        %1038 = vmatpush2.bf16.msra.mxu0 0
        %1039 = vmatprep.subr.bf16.mxu0 0
        %1040 = vmatpush2.bf16.msra.mxu0 0
        %1041 = vmatprep.subr.bf16.mxu0 0
        %1042 = vmatpush2.bf16.msra.mxu0 0
        %1043 = vmatprep.subr.bf16.mxu0 0
        %1044 = vmatpush2.bf16.msra.mxu0 0
        %1045 = vmatprep.mubr.bf16.mxu0 0
        %1046 = vmatmul.mubr.bf16.gmra.mxu0 %v1011
        %v1047 = vpop.f32.mrf.mxu0
        %v1048 = vadd.f32 %v996, %v1047
        %v1049 = vpop.f32.mrf.mxu0
        %v1050 = vpop.f32.mrf.mxu0
        %v1051 = vadd.f32 %v996, %v1050
        %v1052 = vpop.f32.mrf.mxu0
        %1053 = vdwg.mxu0
        %v1054 = vadd.f32 %v837, %v1048
        %v1055 = vadd.f32 %v838, %v1051
        %v1056 = vmul.f32 %v1054, %v368
        %v1057 = vmul.f32 %v1055, %v373
        %1058 = vst.msk [vmem:[#allocation2] sm:$0xff] %vm380, %v1056
        %1059 = vst.msk [vmem:[#allocation2 + $0x8] sm:$0xff] %vm380, %v1057
        %v1060 = vld [vmem:[#allocation2] sm:$0xff]
        %v1061 = vld [vmem:[#allocation2 + $0x8] sm:$0xff]
        %v1062 = vpack.c.bf16 %v1061, %v1060
        %v1063 = vld [vmem:[%s6] sm:$0xf]
        %v1064 = vld [vmem:[%s6 + $0x4] sm:$0xf]
        %v1065 = vld [vmem:[%s6 + $0x8] sm:$0xf]
        %v1066 = vld [vmem:[%s6 + $0xc] sm:$0xf]
        %v1067 = vld [vmem:[%s7] sm:$0x1]
        %v1069 = vlaneseq
        %v1070 = vshrl.u32 %v1069, 7
        %v1071 = vsub.s32 0, %v1070
        %v1072 = vrot.slane %v1067, %v1071
        %v1078 = vunpack.c.l.b16 %v1063
        %v1079 = vunpack.c.l.b16 %v1064
        %v1080 = vunpack.c.l.b16 %v1065
        %v1081 = vunpack.c.l.b16 %v1066
        %v1082 = vpack.c.b16 %v1079, %v1078
        %v1083 = vpack.c.b16 %v1081, %v1080
        %v1087 = vsel %vm380, %v1062, 0
        %1089 = vmatprep.subr.bf16.mxu0 0
        %1090 = vmatpush1.bf16.msra.mxu0 0
        %1091 = vmatprep.subr.bf16.mxu0 0
        %1092 = vmatpush1.bf16.msra.mxu0 0
        %1093 = vmatprep.subr.bf16.mxu0 0
        %1094 = vmatpush1.bf16.msra.mxu0 0
        %1095 = vmatprep.subr.bf16.mxu0 0
        %1096 = vmatpush1.bf16.msra.mxu0 0
        %1097 = vmatprep.subr.bf16.mxu0 0
        %1098 = vmatpush1.bf16.msra.mxu0 0
        %1099 = vmatprep.subr.bf16.mxu0 0
        %1100 = vmatpush1.bf16.msra.mxu0 0
        %1101 = vmatprep.subr.bf16.mxu0 0
        %1102 = vmatpush1.bf16.msra.mxu0 %v1083
        %1103 = vmatprep.subr.bf16.mxu0 0
        %1104 = vmatpush1.bf16.msra.mxu0 %v1082
        %1105 = vmatprep.subr.bf16.mxu0 0
        %1106 = vmatpush2.bf16.msra.mxu0 0
        %1107 = vmatprep.subr.bf16.mxu0 0
        %1108 = vmatpush2.bf16.msra.mxu0 0
        %1109 = vmatprep.subr.bf16.mxu0 0
        %1110 = vmatpush2.bf16.msra.mxu0 0
        %1111 = vmatprep.subr.bf16.mxu0 0
        %1112 = vmatpush2.bf16.msra.mxu0 0
        %1113 = vmatprep.subr.bf16.mxu0 0
        %1114 = vmatpush2.bf16.msra.mxu0 0
        %1115 = vmatprep.subr.bf16.mxu0 0
        %1116 = vmatpush2.bf16.msra.mxu0 0
        %1117 = vmatprep.subr.bf16.mxu0 0
        %1118 = vmatpush2.bf16.msra.mxu0 0
        %1119 = vmatprep.subr.bf16.mxu0 0
        %1120 = vmatpush2.bf16.msra.mxu0 0
        %1121 = vmatprep.mubr.bf16.mxu0 0
        %1122 = vmatmul.mubr.bf16.gmra.mxu0 %v1087
        %v1123 = vpop.f32.mrf.mxu0
        %v1124 = vadd.f32 %v1072, %v1123
        %v1125 = vpop.f32.mrf.mxu0
        %v1126 = vpop.f32.mrf.mxu0
        %v1127 = vadd.f32 %v1072, %v1126
        %v1128 = vpop.f32.mrf.mxu0
        %1129 = vdwg.mxu0
        %v1130 = vmul.f32 %v1124, %v368
        %v1131 = vmul.f32 %v1127, %v373
        %1132 = vst [vmem:[%s344] sm:$0xff] %v1130
        %1133 = vst [vmem:[%s344 + $0x8] sm:$0xff] %v1131
        %v1134 = vsel %vm380, %v1060, 0.0
        %v1135 = vsel %vm380, %v1061, 0.0
        %1136 = vst [vmem:[%s351] sm:$0xff] %v1134
        %1137 = vst [vmem:[%s351 + $0x8] sm:$0xff] %v1135
        %s1138 = sand.u32 %s213, 1
        %s1139 = scalar_lea.sflag [#allocation4], %s1138
        %s1140 = sand.u32 %s213, 1
        %s1141 = smul.addr %s1140, 16
        %s1142 = scalar_lea.vmem [#allocation3], %s1141
        %s1143 = sand.u32 %s239, 1
        %s1144 = scalar_lea.sflag [#allocation6], %s1143
        %s1145 = sand.u32 %s239, 1
        %s1146 = smul.addr %s1145, 16
        %s1147 = scalar_lea.vmem [#allocation5], %s1146
        // Predicated region
        $region53: #{tpu_custom_call.1} parent=51 // pred_check
          %p1148 = pneg %p223
        $region54: #{tpu_custom_call.1} parent=51 // pred_check_branch
          %1150 = sbr.rel (%p1148) target = $region56
        $region55: #{tpu_custom_call.1} parent=51 // pred_region
          %s1152 = ssub.s32 256, 256
          %1153 = vsyncadd %s1139, %s1152
          %s1154 = smul.addr %s27, 2
          %s1155 = smul.addr %s1154, 128
          %s1156 = scalar_lea.hbm %s8, %s1155
          %s1157 = sshll.u32 %s1142, 4
          %s1158 = int_to_ptr.vmem [resolvable:$true] %s1157
          %1163 = dma.vmem_to_hbm [thread:$0]  %s1158, 256, %s1156, %s1139, 128, 128, 8
        $region56: #{tpu_custom_call.1} parent=51 // pred_fallthru
          _
        // Predicated region
        $region57: #{tpu_custom_call.1} parent=51 // pred_check
          %p1164 = pneg %p249
        $region58: #{tpu_custom_call.1} parent=51 // pred_check_branch
          %1166 = sbr.rel (%p1164) target = $region60
        $region59: #{tpu_custom_call.1} parent=51 // pred_region
          %s1168 = ssub.s32 256, 256
          %1169 = vsyncadd %s1144, %s1168
          %s1170 = smul.addr %s27, 2
          %s1171 = smul.addr %s1170, 128
          %s1172 = scalar_lea.hbm %s9, %s1171
          %s1173 = sshll.u32 %s1147, 4
          %s1174 = int_to_ptr.vmem [resolvable:$true] %s1173
          %1179 = dma.vmem_to_hbm [thread:$0]  %s1174, 256, %s1172, %s1144, 128, 128, 8
        $region60: #{tpu_custom_call.1} parent=51 // pred_fallthru
          _
      $region52: #{tpu_custom_call.1} parent=5 // pred_fallthru
        _
      %p1180 = scmp.le.s32.totalorder 2, %s22
      // Predicated region
      $region61: #{tpu_custom_call.1} parent=5 // pred_check
        %p1181 = pneg %p1180
      $region62: #{tpu_custom_call.1} parent=5 // pred_check_branch
        %1183 = sbr.rel (%p1181) target = $region64
      $region63: #{tpu_custom_call.1} parent=5 // pred_region
        %s1184 = ssub.s32 %s22, 2
        // Predicated region
        $region65: #{tpu_custom_call.1} parent=63 // pred_check
          %p1185 = pneg %p229
        $region66: #{tpu_custom_call.1} parent=63 // pred_check_branch
          %1187 = sbr.rel (%p1185) target = $region68
        $region67: #{tpu_custom_call.1} parent=63 // pred_region
          %s1188 = sand.u32 %s214, 1
          %s1189 = scalar_lea.sflag [#allocation4], %s1188
          %s1190 = sand.u32 %s214, 1
          %s1191 = smul.addr %s1190, 16
          %s1192 = scalar_lea.vmem [#allocation3], %s1191
          %1193 = dma.done %s1189, 256
        $region68: #{tpu_custom_call.1} parent=63 // pred_fallthru
          _
        // Predicated region
        $region69: #{tpu_custom_call.1} parent=63 // pred_check
          %p1194 = pneg %p255
        $region70: #{tpu_custom_call.1} parent=63 // pred_check_branch
          %1196 = sbr.rel (%p1194) target = $region72
        $region71: #{tpu_custom_call.1} parent=63 // pred_region
          %s1197 = sand.u32 %s240, 1
          %s1198 = scalar_lea.sflag [#allocation6], %s1197
          %s1199 = sand.u32 %s240, 1
          %s1200 = smul.addr %s1199, 16
          %s1201 = scalar_lea.vmem [#allocation5], %s1200
          %1202 = dma.done %s1198, 256
        $region72: #{tpu_custom_call.1} parent=63 // pred_fallthru
          _
      $region64: #{tpu_custom_call.1} parent=5 // pred_fallthru
        _
    $region6: #{tpu_custom_call.1} parent=1 // loop_footer
      %s26 = sadd.s32 1, %s22
    $region7: #{tpu_custom_call.1} parent=1 // loop_footer_branch
      %21 = sbr.rel target = $region3
    $region8: #{tpu_custom_call.1} parent=1 // loop_exit
      _
    %1203 = vsyncpa [#allocation4], 1
    %s1204 = scalar_lea.sflag [#allocation4], 1
    %1205 = vsyncpa %s1204, 1
    %1206 = vsyncpa [#allocation6], 1
    %s1207 = scalar_lea.sflag [#allocation6], 1
    %1208 = vsyncpa %s1207, 1

</llo_original>
